<compile_context>
chip_gen: v5e
topology: v5e:2x2
jax: 0.10.0
libtpu: 0.0.40
codegen_flags: <defaults>
</compile_context>

<pallas_src>
import functools

import numpy as np

import jax
import jax.numpy as jnp
from jax.experimental import pallas as pl
from jax.experimental.pallas import tpu as pltpu

LN_EPS = 1e-5                      # torch.nn.LayerNorm default
MATMUL_DTYPE = jnp.bfloat16        # MXU operand dtype (f32 accumulation)
NEG_BIAS = -1e9                    # additive mask for cross-batch attention


# ---------------------------------------------------------------------------
# In-kernel helpers (operate on jnp arrays already loaded from refs)
# ---------------------------------------------------------------------------
def _layer_norm(x, g, b):
    mu = jnp.mean(x, axis=-1, keepdims=True)
    var = jnp.mean((x - mu) ** 2, axis=-1, keepdims=True)   # biased, like torch
    return (x - mu) * jax.lax.rsqrt(var + LN_EPS) * g + b


def _softmax_last(x):
    m = jnp.max(x, axis=-1, keepdims=True)
    e = jnp.exp(x - m)
    denom = jnp.sum(e, axis=-1, keepdims=True)
    return e * pl.reciprocal(denom, approx=True)             # EUP reciprocal


# ---------------------------------------------------------------------------
# Fused full-depth kernel:
#   (LN -> MHA -> feature-softmax gate residual -> LN -> MLP (+ x += x))
# repeated `depth` times, on the whole (B*N, D) activation at once.
# ---------------------------------------------------------------------------
def transformer_kernel(x_ref, *refs, heads, dim_head, depth, batch, seq):
    o_ref = refs[-1]
    w_refs = refs[:-1]
    n_per_layer = 10

    x = x_ref[...]                                    # (B*N, D) float32
    bn = batch * seq
    inner = heads * dim_head

    # Compile-time block-diagonal bias: 0 on same-batch (query, key) pairs,
    # -1e9 across batches.  Built from int iota + float convert (no vector
    # integer division).  Computed once, reused across all layers.
    ri = jax.lax.broadcasted_iota(jnp.int32, (bn, bn), 0).astype(jnp.float32)
    ci = jax.lax.broadcasted_iota(jnp.int32, (bn, bn), 1).astype(jnp.float32)
    same_batch = jnp.floor(ri * (1.0 / seq)) == jnp.floor(ci * (1.0 / seq))
    batch_bias = jnp.where(same_batch, 0.0, NEG_BIAS).astype(jnp.float32)

    # TODO(synk): for large depth, replace this unrolled Python loop with a
    # lax.fori_loop over depth-stacked weights (and stream weights from HBM on
    # v7x) -- unnecessary at depth=2.
    for d in range(depth):
        (ln1g, ln1b, wqkv, wout,
         ln2g, ln2b, w1, b1, w2, b2) = w_refs[d * n_per_layer:(d + 1) * n_per_layer]

        # ---------------- Attention(x) ----------------
        xn = _layer_norm(x, ln1g[...], ln1b[...])                      # (BN, D) f32
        # Single fused qkv projection (attention scale pre-folded into q cols).
        qkv = jnp.dot(xn.astype(MATMUL_DTYPE), wqkv[...],
                      preferred_element_type=jnp.float32)              # (BN, 3*inner)
        qkv = qkv.astype(MATMUL_DTYPE)

        head_outs = []
        for h in range(heads):
            lo = h * dim_head
            q_h = qkv[:, 0 * inner + lo: 0 * inner + lo + dim_head]    # (BN, dh)
            k_h = qkv[:, 1 * inner + lo: 1 * inner + lo + dim_head]
            v_h = qkv[:, 2 * inner + lo: 2 * inner + lo + dim_head]
            # q @ k^T without materializing the transpose (contract last dims).
            dots = jax.lax.dot_general(
                q_h, k_h, (((1,), (1,)), ((), ())),
                preferred_element_type=jnp.float32)                    # (BN, BN)
            p = _softmax_last(dots + batch_bias)                       # f32 softmax
            head_outs.append(jnp.dot(p.astype(MATMUL_DTYPE), v_h,
                                     preferred_element_type=jnp.float32))  # (BN, dh)

        # 'b h n d -> b n (h d)' is just a lane-concat of the per-head outputs,
        # then ONE dense (inner, D) output projection (head "reduction" fused).
        attn_cat = jnp.concatenate(head_outs, axis=-1).astype(MATMUL_DTYPE)  # (BN, inner)
        attn_out = jnp.dot(attn_cat, wout[...],
                           preferred_element_type=jnp.float32)         # (BN, D)

        # x = Softmax(dim=2)(attn(x)) * x + x   ==   x * (gate + 1)
        gate = _softmax_last(attn_out)
        x = x * (gate + 1.0)

        # ---------------- FeedForward(x) ----------------
        xn2 = _layer_norm(x, ln2g[...], ln2b[...])
        hpre = jnp.dot(xn2.astype(MATMUL_DTYPE), w1[...],
                       preferred_element_type=jnp.float32) + b1[...]
        # exact (erf) GELU, matching nn.GELU() default
        hact = 0.5 * hpre * (1.0 + jax.lax.erf(hpre * (2.0 ** -0.5)))
        y = jnp.dot(hact.astype(MATMUL_DTYPE), w2[...],
                    preferred_element_type=jnp.float32) + b2[...]

        if d != depth - 1:
            x = y + y                                                  # "x += x"
        else:
            x = y

    o_ref[...] = x                                   # lane-dense (BN, out_pad) store


# ---------------------------------------------------------------------------
# One-time host-side weight preparation (hoisted out of the forward path):
#   - fold the attention scale into the q columns of wqkv,
#   - bf16 cast of all matmul weights (lane-dense 2-D slabs),
#   - zero-pad the last layer's projection to a 128-lane multiple.
# ---------------------------------------------------------------------------
def prepare_weights(params, heads, dim_head, out_dim):
    depth = len(params)
    inner = heads * dim_head
    scale = dim_head ** (-0.5)
    out_pad = ((out_dim + 127) // 128) * 128
    flat = []
    for d, p in enumerate(params):
        wqkv = p["wqkv"].at[:, :inner].multiply(scale)   # fold scale into q cols
        w2, b2 = p["w2"], p["b2"]
        if d == depth - 1:
            pad = out_pad - w2.shape[1]
            if pad:
                w2 = jnp.pad(w2, ((0, 0), (0, pad)))     # zero-pad -> exact zeros
                b2 = jnp.pad(b2, ((0, 0), (0, pad)))
        flat += [
            p["ln1_g"], p["ln1_b"],
            wqkv.astype(MATMUL_DTYPE),
            p["wout"].astype(MATMUL_DTYPE),
            p["ln2_g"], p["ln2_b"],
            p["w1"].astype(MATMUL_DTYPE), p["b1"],
            w2.astype(MATMUL_DTYPE), b2,
        ]
    return flat, out_pad


# ---------------------------------------------------------------------------
# Wrapper: ONE pallas_call, no grid (whole-array VMEM residency, no
# double-buffering of the constant weights).
# ---------------------------------------------------------------------------
def transformer_forward(x, flat_weights, *, heads, dim_head, depth, out_dim, out_pad):
    B, N, D = x.shape
    x2 = x.reshape(B * N, D)                         # free reshape outside kernel

    kernel = functools.partial(transformer_kernel, heads=heads, dim_head=dim_head,
                               depth=depth, batch=B, seq=N)

    out = pl.pallas_call(
        kernel,
        out_shape=jax.ShapeDtypeStruct((B * N, out_pad), jnp.float32),
        compiler_params=pltpu.CompilerParams(
            vmem_limit_bytes=32 * 1024 * 1024),      # explicit, safe on all gens
    )(x2, *flat_weights)

    return out[:, :out_dim].reshape(B, N, out_dim)   # drop lane padding


# ---------------------------------------------------------------------------
# Deterministic parameter init (same shapes as the PyTorch __init__)
# ---------------------------------------------------------------------------
def init_params(key, dim, depth, heads, dim_head, mlp_dim, out_dim):
    inner = heads * dim_head
    params = []
    for d in range(depth):
        last = out_dim if d == depth - 1 else dim
        key, k0, k1, k2, k3, k4, k5 = jax.random.split(key, 7)
        params.append(dict(
            ln1_g=jnp.ones((1, dim), jnp.float32),
            ln1_b=jnp.zeros((1, dim), jnp.float32),
            wqkv=0.05 * jax.random.normal(k0, (dim, 3 * inner), jnp.float32),
            wout=0.05 * jax.random.normal(k1, (inner, dim), jnp.float32),
            ln2_g=jnp.ones((1, dim), jnp.float32),
            ln2_b=jnp.zeros((1, dim), jnp.float32),
            w1=0.05 * jax.random.normal(k2, (dim, mlp_dim), jnp.float32),
            b1=0.05 * jax.random.normal(k3, (1, mlp_dim), jnp.float32),
            w2=0.05 * jax.random.normal(k4, (mlp_dim, last), jnp.float32),
            b2=0.05 * jax.random.normal(k5, (1, last), jnp.float32),
        ))
    return params


# ---------------------------------------------------------------------------
# Pure-JAX f32 reference (mirrors the PyTorch forward) for a correctness check
# ---------------------------------------------------------------------------
def reference_forward(x, params, heads, dim_head):
    def ln(t, g, b):
        mu = t.mean(-1, keepdims=True)
        var = ((t - mu) ** 2).mean(-1, keepdims=True)
        return (t - mu) / jnp.sqrt(var + LN_EPS) * g[0] + b[0]

    depth = len(params)
    for d, p in enumerate(params):
        B, N, D = x.shape
        inner = heads * dim_head
        xn = ln(x, p["ln1_g"], p["ln1_b"])
        qkv = xn @ p["wqkv"]
        q, k, v = jnp.split(qkv, 3, axis=-1)
        q = q.reshape(B, N, heads, dim_head).transpose(0, 2, 1, 3)
        k = k.reshape(B, N, heads, dim_head).transpose(0, 2, 1, 3)
        v = v.reshape(B, N, heads, dim_head).transpose(0, 2, 1, 3)
        dots = jnp.einsum("bhnd,bhmd->bhnm", q, k) * dim_head ** (-0.5)
        attn = jax.nn.softmax(dots, axis=-1)
        o = jnp.einsum("bhnm,bhmd->bhnd", attn, v)
        o = o.transpose(0, 2, 1, 3).reshape(B, N, inner) @ p["wout"]
        x = jax.nn.softmax(o, axis=-1) * x + x
        xn2 = ln(x, p["ln2_g"], p["ln2_b"])
        h = xn2 @ p["w1"] + p["b1"][0]
        h = 0.5 * h * (1.0 + jax.lax.erf(h / jnp.sqrt(2.0)))
        x = h @ p["w2"] + p["b2"][0]
        if d != depth - 1:
            x = x + x                                 # matches torch "x += x"
    return x


if __name__ == "__main__":
    # Small shapes consistent with the module: batch=2, patches=4, frames=2
    # -> seq N = patches * frames = 8, dim=32, depth=2, heads=4, dim_head=8,
    #    mlp_dim=64, out_dim=16.
    B, PATCHES, FRAMES = 2, 4, 2
    N = PATCHES * FRAMES
    DIM, DEPTH, HEADS, DIM_HEAD, MLP_DIM, OUT_DIM = 32, 2, 4, 8, 64, 16

    key = jax.random.PRNGKey(0)
    kx, kp = jax.random.split(key)
    x = jax.random.normal(kx, (B, N, DIM), jnp.float32)
    params = init_params(kp, DIM, DEPTH, HEADS, DIM_HEAD, MLP_DIM, OUT_DIM)

    # Weight prep done ONCE (not in the forward path).
    flat, out_pad = prepare_weights(params, HEADS, DIM_HEAD, OUT_DIM)
    flat = [jax.device_put(w) for w in flat]

    fwd = jax.jit(functools.partial(
        transformer_forward, heads=HEADS, dim_head=DIM_HEAD, depth=DEPTH,
        out_dim=OUT_DIM, out_pad=out_pad))

    y = jax.block_until_ready(fwd(x, flat))

    y_ref = reference_forward(x, params, HEADS, DIM_HEAD)
    assert y.shape == (B, N, OUT_DIM), y.shape
    # bf16 MXU operands (f32 accumulation) + approx EUP reciprocal in softmax
    # vs the all-f32 reference -> loosened tolerance.
    err = float(jnp.max(jnp.abs(y - y_ref)))
    assert np.allclose(np.asarray(y), np.asarray(y_ref), rtol=2e-2, atol=2e-2), err

    print("KERNEL_OK")
</pallas_src>

<mosaic_0001>
module attributes {stable_mosaic.version = 11 : i64} {
  func.func @transformer_kernel(%arg0: memref<16x32xf32, #tpu.memory_space<vmem>>, %arg1: memref<1x32xf32, #tpu.memory_space<vmem>>, %arg2: memref<1x32xf32, #tpu.memory_space<vmem>>, %arg3: memref<32x96xbf16, #tpu.memory_space<vmem>>, %arg4: memref<32x32xbf16, #tpu.memory_space<vmem>>, %arg5: memref<1x32xf32, #tpu.memory_space<vmem>>, %arg6: memref<1x32xf32, #tpu.memory_space<vmem>>, %arg7: memref<32x64xbf16, #tpu.memory_space<vmem>>, %arg8: memref<1x64xf32, #tpu.memory_space<vmem>>, %arg9: memref<64x32xbf16, #tpu.memory_space<vmem>>, %arg10: memref<1x32xf32, #tpu.memory_space<vmem>>, %arg11: memref<1x32xf32, #tpu.memory_space<vmem>>, %arg12: memref<1x32xf32, #tpu.memory_space<vmem>>, %arg13: memref<32x96xbf16, #tpu.memory_space<vmem>>, %arg14: memref<32x32xbf16, #tpu.memory_space<vmem>>, %arg15: memref<1x32xf32, #tpu.memory_space<vmem>>, %arg16: memref<1x32xf32, #tpu.memory_space<vmem>>, %arg17: memref<32x64xbf16, #tpu.memory_space<vmem>>, %arg18: memref<1x64xf32, #tpu.memory_space<vmem>>, %arg19: memref<64x128xbf16, #tpu.memory_space<vmem>>, %arg20: memref<1x128xf32, #tpu.memory_space<vmem>>, %arg21: memref<16x128xf32, #tpu.memory_space<vmem>>) attributes {dimension_semantics = [], scalar_prefetch = 0 : i64, scratch_operands = 0 : i64, tpu.core_type = #tpu.core_type<tc>} {
    %c0 = arith.constant 0 : index
    %c0_0 = arith.constant 0 : index
    %0 = vector.load %arg0[%c0, %c0_0] : memref<16x32xf32, #tpu.memory_space<vmem>>, vector<16x32xf32>
    %1 = tpu.iota {dimensions = array<i32: 0>} : vector<16x16xi32>
    %2 = arith.sitofp %1 : vector<16x16xi32> to vector<16x16xf32>
    %3 = tpu.iota {dimensions = array<i32: 1>} : vector<16x16xi32>
    %4 = arith.sitofp %3 : vector<16x16xi32> to vector<16x16xf32>
    %cst = arith.constant 1.250000e-01 : f32
    %5 = vector.broadcast %cst : f32 to vector<16x16xf32>
    %6 = arith.mulf %2, %5 : vector<16x16xf32>
    %7 = math.floor %6 : vector<16x16xf32>
    %cst_1 = arith.constant 1.250000e-01 : f32
    %8 = vector.broadcast %cst_1 : f32 to vector<16x16xf32>
    %9 = arith.mulf %4, %8 : vector<16x16xf32>
    %10 = math.floor %9 : vector<16x16xf32>
    %11 = arith.cmpf oeq, %7, %10 : vector<16x16xf32>
    %cst_2 = arith.constant 0.000000e+00 : f32
    %cst_3 = arith.constant -1.000000e+09 : f32
    %12 = vector.broadcast %cst_2 : f32 to vector<16x16xf32>
    %13 = vector.broadcast %cst_3 : f32 to vector<16x16xf32>
    %14 = arith.select %11, %12, %13 : vector<16x16xi1>, vector<16x16xf32>
    %c0_4 = arith.constant 0 : index
    %c0_5 = arith.constant 0 : index
    %15 = vector.load %arg1[%c0_4, %c0_5] : memref<1x32xf32, #tpu.memory_space<vmem>>, vector<1x32xf32>
    %c0_6 = arith.constant 0 : index
    %c0_7 = arith.constant 0 : index
    %16 = vector.load %arg2[%c0_6, %c0_7] : memref<1x32xf32, #tpu.memory_space<vmem>>, vector<1x32xf32>
    %cst_8 = arith.constant dense<0.000000e+00> : vector<16xf32>
    %17 = vector.multi_reduction <add>, %0, %cst_8 [1] : vector<16x32xf32> to vector<16xf32>
    %18 = vector.shape_cast %17 : vector<16xf32> to vector<16x1xf32>
    %cst_9 = arith.constant 3.200000e+01 : f32
    %19 = vector.broadcast %cst_9 : f32 to vector<16x1xf32>
    %20 = arith.divf %18, %19 : vector<16x1xf32>
    %21 = vector.broadcast %20 : vector<16x1xf32> to vector<16x32xf32>
    %22 = arith.subf %0, %21 : vector<16x32xf32>
    %23 = arith.mulf %22, %22 : vector<16x32xf32>
    %cst_10 = arith.constant dense<0.000000e+00> : vector<16xf32>
    %24 = vector.multi_reduction <add>, %23, %cst_10 [1] : vector<16x32xf32> to vector<16xf32>
    %25 = vector.shape_cast %24 : vector<16xf32> to vector<16x1xf32>
    %cst_11 = arith.constant 3.200000e+01 : f32
    %26 = vector.broadcast %cst_11 : f32 to vector<16x1xf32>
    %27 = arith.divf %25, %26 : vector<16x1xf32>
    %28 = vector.broadcast %20 : vector<16x1xf32> to vector<16x32xf32>
    %29 = arith.subf %0, %28 : vector<16x32xf32>
    %cst_12 = arith.constant 9.99999974E-6 : f32
    %30 = vector.broadcast %cst_12 : f32 to vector<16x1xf32>
    %31 = arith.addf %27, %30 : vector<16x1xf32>
    %32 = math.rsqrt %31 : vector<16x1xf32>
    %33 = vector.broadcast %32 : vector<16x1xf32> to vector<16x32xf32>
    %34 = arith.mulf %29, %33 : vector<16x32xf32>
    %35 = vector.broadcast %15 : vector<1x32xf32> to vector<16x32xf32>
    %36 = arith.mulf %34, %35 : vector<16x32xf32>
    %37 = vector.broadcast %16 : vector<1x32xf32> to vector<16x32xf32>
    %38 = arith.addf %36, %37 : vector<16x32xf32>
    %39 = arith.truncf %38 : vector<16x32xf32> to vector<16x32xbf16>
    %c0_13 = arith.constant 0 : index
    %c0_14 = arith.constant 0 : index
    %40 = vector.load %arg3[%c0_13, %c0_14] : memref<32x96xbf16, #tpu.memory_space<vmem>>, vector<32x96xbf16>
    %cst_15 = arith.constant dense<0.000000e+00> : vector<16x96xf32>
    %41 = tpu.matmul %39, %40, %cst_15 {dimension_numbers = #tpu.dot_dimension_numbers<[1], [0], [0], [1], [0, 0, 1, 1], [], []>} : vector<16x32xbf16>, vector<32x96xbf16>, vector<16x96xf32> -> vector<16x96xf32>
    %42 = arith.truncf %41 : vector<16x96xf32> to vector<16x96xbf16>
    %43 = vector.extract_strided_slice %42 {offsets = [0, 0], sizes = [16, 8], strides = [1, 1]} : vector<16x96xbf16> to vector<16x8xbf16>
    %44 = vector.extract_strided_slice %42 {offsets = [0, 32], sizes = [16, 8], strides = [1, 1]} : vector<16x96xbf16> to vector<16x8xbf16>
    %45 = vector.extract_strided_slice %42 {offsets = [0, 64], sizes = [16, 8], strides = [1, 1]} : vector<16x96xbf16> to vector<16x8xbf16>
    %cst_16 = arith.constant dense<0.000000e+00> : vector<16x16xf32>
    %46 = tpu.matmul %43, %44, %cst_16 {dimension_numbers = #tpu.dot_dimension_numbers<[1], [1], [0], [0], [0, 0, 1, 0], [], []>} : vector<16x8xbf16>, vector<16x8xbf16>, vector<16x16xf32> -> vector<16x16xf32>
    %47 = arith.addf %46, %14 : vector<16x16xf32>
    %cst_17 = arith.constant dense<0xFF800000> : vector<16xf32>
    %48 = vector.multi_reduction <maximumf>, %47, %cst_17 [1] : vector<16x16xf32> to vector<16xf32>
    %49 = vector.shape_cast %48 : vector<16xf32> to vector<16x1xf32>
    %50 = vector.broadcast %49 : vector<16x1xf32> to vector<16x16xf32>
    %51 = arith.subf %47, %50 : vector<16x16xf32>
    %52 = math.exp %51 : vector<16x16xf32>
    %cst_18 = arith.constant dense<0.000000e+00> : vector<16xf32>
    %53 = vector.multi_reduction <add>, %52, %cst_18 [1] : vector<16x16xf32> to vector<16xf32>
    %54 = vector.shape_cast %53 : vector<16xf32> to vector<16x1xf32>
    %55 = tpu.reciprocal %54 {approx = true} : vector<16x1xf32> -> vector<16x1xf32>
    %56 = vector.broadcast %55 : vector<16x1xf32> to vector<16x16xf32>
    %57 = arith.mulf %52, %56 : vector<16x16xf32>
    %58 = arith.truncf %57 : vector<16x16xf32> to vector<16x16xbf16>
    %cst_19 = arith.constant dense<0.000000e+00> : vector<16x8xf32>
    %59 = tpu.matmul %58, %45, %cst_19 {dimension_numbers = #tpu.dot_dimension_numbers<[1], [0], [0], [1], [0, 0, 1, 1], [], []>} : vector<16x16xbf16>, vector<16x8xbf16>, vector<16x8xf32> -> vector<16x8xf32>
    %60 = vector.extract_strided_slice %42 {offsets = [0, 8], sizes = [16, 8], strides = [1, 1]} : vector<16x96xbf16> to vector<16x8xbf16>
    %61 = vector.extract_strided_slice %42 {offsets = [0, 40], sizes = [16, 8], strides = [1, 1]} : vector<16x96xbf16> to vector<16x8xbf16>
    %62 = vector.extract_strided_slice %42 {offsets = [0, 72], sizes = [16, 8], strides = [1, 1]} : vector<16x96xbf16> to vector<16x8xbf16>
    %cst_20 = arith.constant dense<0.000000e+00> : vector<16x16xf32>
    %63 = tpu.matmul %60, %61, %cst_20 {dimension_numbers = #tpu.dot_dimension_numbers<[1], [1], [0], [0], [0, 0, 1, 0], [], []>} : vector<16x8xbf16>, vector<16x8xbf16>, vector<16x16xf32> -> vector<16x16xf32>
    %64 = arith.addf %63, %14 : vector<16x16xf32>
    %cst_21 = arith.constant dense<0xFF800000> : vector<16xf32>
    %65 = vector.multi_reduction <maximumf>, %64, %cst_21 [1] : vector<16x16xf32> to vector<16xf32>
    %66 = vector.shape_cast %65 : vector<16xf32> to vector<16x1xf32>
    %67 = vector.broadcast %66 : vector<16x1xf32> to vector<16x16xf32>
    %68 = arith.subf %64, %67 : vector<16x16xf32>
    %69 = math.exp %68 : vector<16x16xf32>
    %cst_22 = arith.constant dense<0.000000e+00> : vector<16xf32>
    %70 = vector.multi_reduction <add>, %69, %cst_22 [1] : vector<16x16xf32> to vector<16xf32>
    %71 = vector.shape_cast %70 : vector<16xf32> to vector<16x1xf32>
    %72 = tpu.reciprocal %71 {approx = true} : vector<16x1xf32> -> vector<16x1xf32>
    %73 = vector.broadcast %72 : vector<16x1xf32> to vector<16x16xf32>
    %74 = arith.mulf %69, %73 : vector<16x16xf32>
    %75 = arith.truncf %74 : vector<16x16xf32> to vector<16x16xbf16>
    %cst_23 = arith.constant dense<0.000000e+00> : vector<16x8xf32>
    %76 = tpu.matmul %75, %62, %cst_23 {dimension_numbers = #tpu.dot_dimension_numbers<[1], [0], [0], [1], [0, 0, 1, 1], [], []>} : vector<16x16xbf16>, vector<16x8xbf16>, vector<16x8xf32> -> vector<16x8xf32>
    %77 = vector.extract_strided_slice %42 {offsets = [0, 16], sizes = [16, 8], strides = [1, 1]} : vector<16x96xbf16> to vector<16x8xbf16>
    %78 = vector.extract_strided_slice %42 {offsets = [0, 48], sizes = [16, 8], strides = [1, 1]} : vector<16x96xbf16> to vector<16x8xbf16>
    %79 = vector.extract_strided_slice %42 {offsets = [0, 80], sizes = [16, 8], strides = [1, 1]} : vector<16x96xbf16> to vector<16x8xbf16>
    %cst_24 = arith.constant dense<0.000000e+00> : vector<16x16xf32>
    %80 = tpu.matmul %77, %78, %cst_24 {dimension_numbers = #tpu.dot_dimension_numbers<[1], [1], [0], [0], [0, 0, 1, 0], [], []>} : vector<16x8xbf16>, vector<16x8xbf16>, vector<16x16xf32> -> vector<16x16xf32>
    %81 = arith.addf %80, %14 : vector<16x16xf32>
    %cst_25 = arith.constant dense<0xFF800000> : vector<16xf32>
    %82 = vector.multi_reduction <maximumf>, %81, %cst_25 [1] : vector<16x16xf32> to vector<16xf32>
    %83 = vector.shape_cast %82 : vector<16xf32> to vector<16x1xf32>
    %84 = vector.broadcast %83 : vector<16x1xf32> to vector<16x16xf32>
    %85 = arith.subf %81, %84 : vector<16x16xf32>
    %86 = math.exp %85 : vector<16x16xf32>
    %cst_26 = arith.constant dense<0.000000e+00> : vector<16xf32>
    %87 = vector.multi_reduction <add>, %86, %cst_26 [1] : vector<16x16xf32> to vector<16xf32>
    %88 = vector.shape_cast %87 : vector<16xf32> to vector<16x1xf32>
    %89 = tpu.reciprocal %88 {approx = true} : vector<16x1xf32> -> vector<16x1xf32>
    %90 = vector.broadcast %89 : vector<16x1xf32> to vector<16x16xf32>
    %91 = arith.mulf %86, %90 : vector<16x16xf32>
    %92 = arith.truncf %91 : vector<16x16xf32> to vector<16x16xbf16>
    %cst_27 = arith.constant dense<0.000000e+00> : vector<16x8xf32>
    %93 = tpu.matmul %92, %79, %cst_27 {dimension_numbers = #tpu.dot_dimension_numbers<[1], [0], [0], [1], [0, 0, 1, 1], [], []>} : vector<16x16xbf16>, vector<16x8xbf16>, vector<16x8xf32> -> vector<16x8xf32>
    %94 = vector.extract_strided_slice %42 {offsets = [0, 24], sizes = [16, 8], strides = [1, 1]} : vector<16x96xbf16> to vector<16x8xbf16>
    %95 = vector.extract_strided_slice %42 {offsets = [0, 56], sizes = [16, 8], strides = [1, 1]} : vector<16x96xbf16> to vector<16x8xbf16>
    %96 = vector.extract_strided_slice %42 {offsets = [0, 88], sizes = [16, 8], strides = [1, 1]} : vector<16x96xbf16> to vector<16x8xbf16>
    %cst_28 = arith.constant dense<0.000000e+00> : vector<16x16xf32>
    %97 = tpu.matmul %94, %95, %cst_28 {dimension_numbers = #tpu.dot_dimension_numbers<[1], [1], [0], [0], [0, 0, 1, 0], [], []>} : vector<16x8xbf16>, vector<16x8xbf16>, vector<16x16xf32> -> vector<16x16xf32>
    %98 = arith.addf %97, %14 : vector<16x16xf32>
    %cst_29 = arith.constant dense<0xFF800000> : vector<16xf32>
    %99 = vector.multi_reduction <maximumf>, %98, %cst_29 [1] : vector<16x16xf32> to vector<16xf32>
    %100 = vector.shape_cast %99 : vector<16xf32> to vector<16x1xf32>
    %101 = vector.broadcast %100 : vector<16x1xf32> to vector<16x16xf32>
    %102 = arith.subf %98, %101 : vector<16x16xf32>
    %103 = math.exp %102 : vector<16x16xf32>
    %cst_30 = arith.constant dense<0.000000e+00> : vector<16xf32>
    %104 = vector.multi_reduction <add>, %103, %cst_30 [1] : vector<16x16xf32> to vector<16xf32>
    %105 = vector.shape_cast %104 : vector<16xf32> to vector<16x1xf32>
    %106 = tpu.reciprocal %105 {approx = true} : vector<16x1xf32> -> vector<16x1xf32>
    %107 = vector.broadcast %106 : vector<16x1xf32> to vector<16x16xf32>
    %108 = arith.mulf %103, %107 : vector<16x16xf32>
    %109 = arith.truncf %108 : vector<16x16xf32> to vector<16x16xbf16>
    %cst_31 = arith.constant dense<0.000000e+00> : vector<16x8xf32>
    %110 = tpu.matmul %109, %96, %cst_31 {dimension_numbers = #tpu.dot_dimension_numbers<[1], [0], [0], [1], [0, 0, 1, 1], [], []>} : vector<16x16xbf16>, vector<16x8xbf16>, vector<16x8xf32> -> vector<16x8xf32>
    %111 = tpu.concatenate %59, %76, %93, %110 in 1 : vector<16x8xf32>, vector<16x8xf32>, vector<16x8xf32>, vector<16x8xf32> -> vector<16x32xf32>
    %112 = arith.truncf %111 : vector<16x32xf32> to vector<16x32xbf16>
    %c0_32 = arith.constant 0 : index
    %c0_33 = arith.constant 0 : index
    %113 = vector.load %arg4[%c0_32, %c0_33] : memref<32x32xbf16, #tpu.memory_space<vmem>>, vector<32x32xbf16>
    %cst_34 = arith.constant dense<0.000000e+00> : vector<16x32xf32>
    %114 = tpu.matmul %112, %113, %cst_34 {dimension_numbers = #tpu.dot_dimension_numbers<[1], [0], [0], [1], [0, 0, 1, 1], [], []>} : vector<16x32xbf16>, vector<32x32xbf16>, vector<16x32xf32> -> vector<16x32xf32>
    %cst_35 = arith.constant dense<0xFF800000> : vector<16xf32>
    %115 = vector.multi_reduction <maximumf>, %114, %cst_35 [1] : vector<16x32xf32> to vector<16xf32>
    %116 = vector.shape_cast %115 : vector<16xf32> to vector<16x1xf32>
    %117 = vector.broadcast %116 : vector<16x1xf32> to vector<16x32xf32>
    %118 = arith.subf %114, %117 : vector<16x32xf32>
    %119 = math.exp %118 : vector<16x32xf32>
    %cst_36 = arith.constant dense<0.000000e+00> : vector<16xf32>
    %120 = vector.multi_reduction <add>, %119, %cst_36 [1] : vector<16x32xf32> to vector<16xf32>
    %121 = vector.shape_cast %120 : vector<16xf32> to vector<16x1xf32>
    %122 = tpu.reciprocal %121 {approx = true} : vector<16x1xf32> -> vector<16x1xf32>
    %123 = vector.broadcast %122 : vector<16x1xf32> to vector<16x32xf32>
    %124 = arith.mulf %119, %123 : vector<16x32xf32>
    %cst_37 = arith.constant 1.000000e+00 : f32
    %125 = vector.broadcast %cst_37 : f32 to vector<16x32xf32>
    %126 = arith.addf %124, %125 : vector<16x32xf32>
    %127 = arith.mulf %0, %126 : vector<16x32xf32>
    %c0_38 = arith.constant 0 : index
    %c0_39 = arith.constant 0 : index
    %128 = vector.load %arg5[%c0_38, %c0_39] : memref<1x32xf32, #tpu.memory_space<vmem>>, vector<1x32xf32>
    %c0_40 = arith.constant 0 : index
    %c0_41 = arith.constant 0 : index
    %129 = vector.load %arg6[%c0_40, %c0_41] : memref<1x32xf32, #tpu.memory_space<vmem>>, vector<1x32xf32>
    %cst_42 = arith.constant dense<0.000000e+00> : vector<16xf32>
    %130 = vector.multi_reduction <add>, %127, %cst_42 [1] : vector<16x32xf32> to vector<16xf32>
    %131 = vector.shape_cast %130 : vector<16xf32> to vector<16x1xf32>
    %cst_43 = arith.constant 3.200000e+01 : f32
    %132 = vector.broadcast %cst_43 : f32 to vector<16x1xf32>
    %133 = arith.divf %131, %132 : vector<16x1xf32>
    %134 = vector.broadcast %133 : vector<16x1xf32> to vector<16x32xf32>
    %135 = arith.subf %127, %134 : vector<16x32xf32>
    %136 = arith.mulf %135, %135 : vector<16x32xf32>
    %cst_44 = arith.constant dense<0.000000e+00> : vector<16xf32>
    %137 = vector.multi_reduction <add>, %136, %cst_44 [1] : vector<16x32xf32> to vector<16xf32>
    %138 = vector.shape_cast %137 : vector<16xf32> to vector<16x1xf32>
    %cst_45 = arith.constant 3.200000e+01 : f32
    %139 = vector.broadcast %cst_45 : f32 to vector<16x1xf32>
    %140 = arith.divf %138, %139 : vector<16x1xf32>
    %141 = vector.broadcast %133 : vector<16x1xf32> to vector<16x32xf32>
    %142 = arith.subf %127, %141 : vector<16x32xf32>
    %cst_46 = arith.constant 9.99999974E-6 : f32
    %143 = vector.broadcast %cst_46 : f32 to vector<16x1xf32>
    %144 = arith.addf %140, %143 : vector<16x1xf32>
    %145 = math.rsqrt %144 : vector<16x1xf32>
    %146 = vector.broadcast %145 : vector<16x1xf32> to vector<16x32xf32>
    %147 = arith.mulf %142, %146 : vector<16x32xf32>
    %148 = vector.broadcast %128 : vector<1x32xf32> to vector<16x32xf32>
    %149 = arith.mulf %147, %148 : vector<16x32xf32>
    %150 = vector.broadcast %129 : vector<1x32xf32> to vector<16x32xf32>
    %151 = arith.addf %149, %150 : vector<16x32xf32>
    %152 = arith.truncf %151 : vector<16x32xf32> to vector<16x32xbf16>
    %c0_47 = arith.constant 0 : index
    %c0_48 = arith.constant 0 : index
    %153 = vector.load %arg7[%c0_47, %c0_48] : memref<32x64xbf16, #tpu.memory_space<vmem>>, vector<32x64xbf16>
    %cst_49 = arith.constant dense<0.000000e+00> : vector<16x64xf32>
    %154 = tpu.matmul %152, %153, %cst_49 {dimension_numbers = #tpu.dot_dimension_numbers<[1], [0], [0], [1], [0, 0, 1, 1], [], []>} : vector<16x32xbf16>, vector<32x64xbf16>, vector<16x64xf32> -> vector<16x64xf32>
    %c0_50 = arith.constant 0 : index
    %c0_51 = arith.constant 0 : index
    %155 = vector.load %arg8[%c0_50, %c0_51] : memref<1x64xf32, #tpu.memory_space<vmem>>, vector<1x64xf32>
    %156 = vector.broadcast %155 : vector<1x64xf32> to vector<16x64xf32>
    %157 = arith.addf %154, %156 : vector<16x64xf32>
    %cst_52 = arith.constant 5.000000e-01 : f32
    %158 = vector.broadcast %cst_52 : f32 to vector<16x64xf32>
    %159 = arith.mulf %158, %157 : vector<16x64xf32>
    %cst_53 = arith.constant 0.707106769 : f32
    %160 = vector.broadcast %cst_53 : f32 to vector<16x64xf32>
    %161 = arith.mulf %157, %160 : vector<16x64xf32>
    %162 = math.erf %161 : vector<16x64xf32>
    %cst_54 = arith.constant 1.000000e+00 : f32
    %163 = vector.broadcast %cst_54 : f32 to vector<16x64xf32>
    %164 = arith.addf %163, %162 : vector<16x64xf32>
    %165 = arith.mulf %159, %164 : vector<16x64xf32>
    %166 = arith.truncf %165 : vector<16x64xf32> to vector<16x64xbf16>
    %c0_55 = arith.constant 0 : index
    %c0_56 = arith.constant 0 : index
    %167 = vector.load %arg9[%c0_55, %c0_56] : memref<64x32xbf16, #tpu.memory_space<vmem>>, vector<64x32xbf16>
    %cst_57 = arith.constant dense<0.000000e+00> : vector<16x32xf32>
    %168 = tpu.matmul %166, %167, %cst_57 {dimension_numbers = #tpu.dot_dimension_numbers<[1], [0], [0], [1], [0, 0, 1, 1], [], []>} : vector<16x64xbf16>, vector<64x32xbf16>, vector<16x32xf32> -> vector<16x32xf32>
    %c0_58 = arith.constant 0 : index
    %c0_59 = arith.constant 0 : index
    %169 = vector.load %arg10[%c0_58, %c0_59] : memref<1x32xf32, #tpu.memory_space<vmem>>, vector<1x32xf32>
    %170 = vector.broadcast %169 : vector<1x32xf32> to vector<16x32xf32>
    %171 = arith.addf %168, %170 : vector<16x32xf32>
    %172 = arith.addf %171, %171 : vector<16x32xf32>
    %c0_60 = arith.constant 0 : index
    %c0_61 = arith.constant 0 : index
    %173 = vector.load %arg11[%c0_60, %c0_61] : memref<1x32xf32, #tpu.memory_space<vmem>>, vector<1x32xf32>
    %c0_62 = arith.constant 0 : index
    %c0_63 = arith.constant 0 : index
    %174 = vector.load %arg12[%c0_62, %c0_63] : memref<1x32xf32, #tpu.memory_space<vmem>>, vector<1x32xf32>
    %cst_64 = arith.constant dense<0.000000e+00> : vector<16xf32>
    %175 = vector.multi_reduction <add>, %172, %cst_64 [1] : vector<16x32xf32> to vector<16xf32>
    %176 = vector.shape_cast %175 : vector<16xf32> to vector<16x1xf32>
    %cst_65 = arith.constant 3.200000e+01 : f32
    %177 = vector.broadcast %cst_65 : f32 to vector<16x1xf32>
    %178 = arith.divf %176, %177 : vector<16x1xf32>
    %179 = vector.broadcast %178 : vector<16x1xf32> to vector<16x32xf32>
    %180 = arith.subf %172, %179 : vector<16x32xf32>
    %181 = arith.mulf %180, %180 : vector<16x32xf32>
    %cst_66 = arith.constant dense<0.000000e+00> : vector<16xf32>
    %182 = vector.multi_reduction <add>, %181, %cst_66 [1] : vector<16x32xf32> to vector<16xf32>
    %183 = vector.shape_cast %182 : vector<16xf32> to vector<16x1xf32>
    %cst_67 = arith.constant 3.200000e+01 : f32
    %184 = vector.broadcast %cst_67 : f32 to vector<16x1xf32>
    %185 = arith.divf %183, %184 : vector<16x1xf32>
    %186 = vector.broadcast %178 : vector<16x1xf32> to vector<16x32xf32>
    %187 = arith.subf %172, %186 : vector<16x32xf32>
    %cst_68 = arith.constant 9.99999974E-6 : f32
    %188 = vector.broadcast %cst_68 : f32 to vector<16x1xf32>
    %189 = arith.addf %185, %188 : vector<16x1xf32>
    %190 = math.rsqrt %189 : vector<16x1xf32>
    %191 = vector.broadcast %190 : vector<16x1xf32> to vector<16x32xf32>
    %192 = arith.mulf %187, %191 : vector<16x32xf32>
    %193 = vector.broadcast %173 : vector<1x32xf32> to vector<16x32xf32>
    %194 = arith.mulf %192, %193 : vector<16x32xf32>
    %195 = vector.broadcast %174 : vector<1x32xf32> to vector<16x32xf32>
    %196 = arith.addf %194, %195 : vector<16x32xf32>
    %197 = arith.truncf %196 : vector<16x32xf32> to vector<16x32xbf16>
    %c0_69 = arith.constant 0 : index
    %c0_70 = arith.constant 0 : index
    %198 = vector.load %arg13[%c0_69, %c0_70] : memref<32x96xbf16, #tpu.memory_space<vmem>>, vector<32x96xbf16>
    %cst_71 = arith.constant dense<0.000000e+00> : vector<16x96xf32>
    %199 = tpu.matmul %197, %198, %cst_71 {dimension_numbers = #tpu.dot_dimension_numbers<[1], [0], [0], [1], [0, 0, 1, 1], [], []>} : vector<16x32xbf16>, vector<32x96xbf16>, vector<16x96xf32> -> vector<16x96xf32>
    %200 = arith.truncf %199 : vector<16x96xf32> to vector<16x96xbf16>
    %201 = vector.extract_strided_slice %200 {offsets = [0, 0], sizes = [16, 8], strides = [1, 1]} : vector<16x96xbf16> to vector<16x8xbf16>
    %202 = vector.extract_strided_slice %200 {offsets = [0, 32], sizes = [16, 8], strides = [1, 1]} : vector<16x96xbf16> to vector<16x8xbf16>
    %203 = vector.extract_strided_slice %200 {offsets = [0, 64], sizes = [16, 8], strides = [1, 1]} : vector<16x96xbf16> to vector<16x8xbf16>
    %cst_72 = arith.constant dense<0.000000e+00> : vector<16x16xf32>
    %204 = tpu.matmul %201, %202, %cst_72 {dimension_numbers = #tpu.dot_dimension_numbers<[1], [1], [0], [0], [0, 0, 1, 0], [], []>} : vector<16x8xbf16>, vector<16x8xbf16>, vector<16x16xf32> -> vector<16x16xf32>
    %205 = arith.addf %204, %14 : vector<16x16xf32>
    %cst_73 = arith.constant dense<0xFF800000> : vector<16xf32>
    %206 = vector.multi_reduction <maximumf>, %205, %cst_73 [1] : vector<16x16xf32> to vector<16xf32>
    %207 = vector.shape_cast %206 : vector<16xf32> to vector<16x1xf32>
    %208 = vector.broadcast %207 : vector<16x1xf32> to vector<16x16xf32>
    %209 = arith.subf %205, %208 : vector<16x16xf32>
    %210 = math.exp %209 : vector<16x16xf32>
    %cst_74 = arith.constant dense<0.000000e+00> : vector<16xf32>
    %211 = vector.multi_reduction <add>, %210, %cst_74 [1] : vector<16x16xf32> to vector<16xf32>
    %212 = vector.shape_cast %211 : vector<16xf32> to vector<16x1xf32>
    %213 = tpu.reciprocal %212 {approx = true} : vector<16x1xf32> -> vector<16x1xf32>
    %214 = vector.broadcast %213 : vector<16x1xf32> to vector<16x16xf32>
    %215 = arith.mulf %210, %214 : vector<16x16xf32>
    %216 = arith.truncf %215 : vector<16x16xf32> to vector<16x16xbf16>
    %cst_75 = arith.constant dense<0.000000e+00> : vector<16x8xf32>
    %217 = tpu.matmul %216, %203, %cst_75 {dimension_numbers = #tpu.dot_dimension_numbers<[1], [0], [0], [1], [0, 0, 1, 1], [], []>} : vector<16x16xbf16>, vector<16x8xbf16>, vector<16x8xf32> -> vector<16x8xf32>
    %218 = vector.extract_strided_slice %200 {offsets = [0, 8], sizes = [16, 8], strides = [1, 1]} : vector<16x96xbf16> to vector<16x8xbf16>
    %219 = vector.extract_strided_slice %200 {offsets = [0, 40], sizes = [16, 8], strides = [1, 1]} : vector<16x96xbf16> to vector<16x8xbf16>
    %220 = vector.extract_strided_slice %200 {offsets = [0, 72], sizes = [16, 8], strides = [1, 1]} : vector<16x96xbf16> to vector<16x8xbf16>
    %cst_76 = arith.constant dense<0.000000e+00> : vector<16x16xf32>
    %221 = tpu.matmul %218, %219, %cst_76 {dimension_numbers = #tpu.dot_dimension_numbers<[1], [1], [0], [0], [0, 0, 1, 0], [], []>} : vector<16x8xbf16>, vector<16x8xbf16>, vector<16x16xf32> -> vector<16x16xf32>
    %222 = arith.addf %221, %14 : vector<16x16xf32>
    %cst_77 = arith.constant dense<0xFF800000> : vector<16xf32>
    %223 = vector.multi_reduction <maximumf>, %222, %cst_77 [1] : vector<16x16xf32> to vector<16xf32>
    %224 = vector.shape_cast %223 : vector<16xf32> to vector<16x1xf32>
    %225 = vector.broadcast %224 : vector<16x1xf32> to vector<16x16xf32>
    %226 = arith.subf %222, %225 : vector<16x16xf32>
    %227 = math.exp %226 : vector<16x16xf32>
    %cst_78 = arith.constant dense<0.000000e+00> : vector<16xf32>
    %228 = vector.multi_reduction <add>, %227, %cst_78 [1] : vector<16x16xf32> to vector<16xf32>
    %229 = vector.shape_cast %228 : vector<16xf32> to vector<16x1xf32>
    %230 = tpu.reciprocal %229 {approx = true} : vector<16x1xf32> -> vector<16x1xf32>
    %231 = vector.broadcast %230 : vector<16x1xf32> to vector<16x16xf32>
    %232 = arith.mulf %227, %231 : vector<16x16xf32>
    %233 = arith.truncf %232 : vector<16x16xf32> to vector<16x16xbf16>
    %cst_79 = arith.constant dense<0.000000e+00> : vector<16x8xf32>
    %234 = tpu.matmul %233, %220, %cst_79 {dimension_numbers = #tpu.dot_dimension_numbers<[1], [0], [0], [1], [0, 0, 1, 1], [], []>} : vector<16x16xbf16>, vector<16x8xbf16>, vector<16x8xf32> -> vector<16x8xf32>
    %235 = vector.extract_strided_slice %200 {offsets = [0, 16], sizes = [16, 8], strides = [1, 1]} : vector<16x96xbf16> to vector<16x8xbf16>
    %236 = vector.extract_strided_slice %200 {offsets = [0, 48], sizes = [16, 8], strides = [1, 1]} : vector<16x96xbf16> to vector<16x8xbf16>
    %237 = vector.extract_strided_slice %200 {offsets = [0, 80], sizes = [16, 8], strides = [1, 1]} : vector<16x96xbf16> to vector<16x8xbf16>
    %cst_80 = arith.constant dense<0.000000e+00> : vector<16x16xf32>
    %238 = tpu.matmul %235, %236, %cst_80 {dimension_numbers = #tpu.dot_dimension_numbers<[1], [1], [0], [0], [0, 0, 1, 0], [], []>} : vector<16x8xbf16>, vector<16x8xbf16>, vector<16x16xf32> -> vector<16x16xf32>
    %239 = arith.addf %238, %14 : vector<16x16xf32>
    %cst_81 = arith.constant dense<0xFF800000> : vector<16xf32>
    %240 = vector.multi_reduction <maximumf>, %239, %cst_81 [1] : vector<16x16xf32> to vector<16xf32>
    %241 = vector.shape_cast %240 : vector<16xf32> to vector<16x1xf32>
    %242 = vector.broadcast %241 : vector<16x1xf32> to vector<16x16xf32>
    %243 = arith.subf %239, %242 : vector<16x16xf32>
    %244 = math.exp %243 : vector<16x16xf32>
    %cst_82 = arith.constant dense<0.000000e+00> : vector<16xf32>
    %245 = vector.multi_reduction <add>, %244, %cst_82 [1] : vector<16x16xf32> to vector<16xf32>
    %246 = vector.shape_cast %245 : vector<16xf32> to vector<16x1xf32>
    %247 = tpu.reciprocal %246 {approx = true} : vector<16x1xf32> -> vector<16x1xf32>
    %248 = vector.broadcast %247 : vector<16x1xf32> to vector<16x16xf32>
    %249 = arith.mulf %244, %248 : vector<16x16xf32>
    %250 = arith.truncf %249 : vector<16x16xf32> to vector<16x16xbf16>
    %cst_83 = arith.constant dense<0.000000e+00> : vector<16x8xf32>
    %251 = tpu.matmul %250, %237, %cst_83 {dimension_numbers = #tpu.dot_dimension_numbers<[1], [0], [0], [1], [0, 0, 1, 1], [], []>} : vector<16x16xbf16>, vector<16x8xbf16>, vector<16x8xf32> -> vector<16x8xf32>
    %252 = vector.extract_strided_slice %200 {offsets = [0, 24], sizes = [16, 8], strides = [1, 1]} : vector<16x96xbf16> to vector<16x8xbf16>
    %253 = vector.extract_strided_slice %200 {offsets = [0, 56], sizes = [16, 8], strides = [1, 1]} : vector<16x96xbf16> to vector<16x8xbf16>
    %254 = vector.extract_strided_slice %200 {offsets = [0, 88], sizes = [16, 8], strides = [1, 1]} : vector<16x96xbf16> to vector<16x8xbf16>
    %cst_84 = arith.constant dense<0.000000e+00> : vector<16x16xf32>
    %255 = tpu.matmul %252, %253, %cst_84 {dimension_numbers = #tpu.dot_dimension_numbers<[1], [1], [0], [0], [0, 0, 1, 0], [], []>} : vector<16x8xbf16>, vector<16x8xbf16>, vector<16x16xf32> -> vector<16x16xf32>
    %256 = arith.addf %255, %14 : vector<16x16xf32>
    %cst_85 = arith.constant dense<0xFF800000> : vector<16xf32>
    %257 = vector.multi_reduction <maximumf>, %256, %cst_85 [1] : vector<16x16xf32> to vector<16xf32>
    %258 = vector.shape_cast %257 : vector<16xf32> to vector<16x1xf32>
    %259 = vector.broadcast %258 : vector<16x1xf32> to vector<16x16xf32>
    %260 = arith.subf %256, %259 : vector<16x16xf32>
    %261 = math.exp %260 : vector<16x16xf32>
    %cst_86 = arith.constant dense<0.000000e+00> : vector<16xf32>
    %262 = vector.multi_reduction <add>, %261, %cst_86 [1] : vector<16x16xf32> to vector<16xf32>
    %263 = vector.shape_cast %262 : vector<16xf32> to vector<16x1xf32>
    %264 = tpu.reciprocal %263 {approx = true} : vector<16x1xf32> -> vector<16x1xf32>
    %265 = vector.broadcast %264 : vector<16x1xf32> to vector<16x16xf32>
    %266 = arith.mulf %261, %265 : vector<16x16xf32>
    %267 = arith.truncf %266 : vector<16x16xf32> to vector<16x16xbf16>
    %cst_87 = arith.constant dense<0.000000e+00> : vector<16x8xf32>
    %268 = tpu.matmul %267, %254, %cst_87 {dimension_numbers = #tpu.dot_dimension_numbers<[1], [0], [0], [1], [0, 0, 1, 1], [], []>} : vector<16x16xbf16>, vector<16x8xbf16>, vector<16x8xf32> -> vector<16x8xf32>
    %269 = tpu.concatenate %217, %234, %251, %268 in 1 : vector<16x8xf32>, vector<16x8xf32>, vector<16x8xf32>, vector<16x8xf32> -> vector<16x32xf32>
    %270 = arith.truncf %269 : vector<16x32xf32> to vector<16x32xbf16>
    %c0_88 = arith.constant 0 : index
    %c0_89 = arith.constant 0 : index
    %271 = vector.load %arg14[%c0_88, %c0_89] : memref<32x32xbf16, #tpu.memory_space<vmem>>, vector<32x32xbf16>
    %cst_90 = arith.constant dense<0.000000e+00> : vector<16x32xf32>
    %272 = tpu.matmul %270, %271, %cst_90 {dimension_numbers = #tpu.dot_dimension_numbers<[1], [0], [0], [1], [0, 0, 1, 1], [], []>} : vector<16x32xbf16>, vector<32x32xbf16>, vector<16x32xf32> -> vector<16x32xf32>
    %cst_91 = arith.constant dense<0xFF800000> : vector<16xf32>
    %273 = vector.multi_reduction <maximumf>, %272, %cst_91 [1] : vector<16x32xf32> to vector<16xf32>
    %274 = vector.shape_cast %273 : vector<16xf32> to vector<16x1xf32>
    %275 = vector.broadcast %274 : vector<16x1xf32> to vector<16x32xf32>
    %276 = arith.subf %272, %275 : vector<16x32xf32>
    %277 = math.exp %276 : vector<16x32xf32>
    %cst_92 = arith.constant dense<0.000000e+00> : vector<16xf32>
    %278 = vector.multi_reduction <add>, %277, %cst_92 [1] : vector<16x32xf32> to vector<16xf32>
    %279 = vector.shape_cast %278 : vector<16xf32> to vector<16x1xf32>
    %280 = tpu.reciprocal %279 {approx = true} : vector<16x1xf32> -> vector<16x1xf32>
    %281 = vector.broadcast %280 : vector<16x1xf32> to vector<16x32xf32>
    %282 = arith.mulf %277, %281 : vector<16x32xf32>
    %cst_93 = arith.constant 1.000000e+00 : f32
    %283 = vector.broadcast %cst_93 : f32 to vector<16x32xf32>
    %284 = arith.addf %282, %283 : vector<16x32xf32>
    %285 = arith.mulf %172, %284 : vector<16x32xf32>
    %c0_94 = arith.constant 0 : index
    %c0_95 = arith.constant 0 : index
    %286 = vector.load %arg15[%c0_94, %c0_95] : memref<1x32xf32, #tpu.memory_space<vmem>>, vector<1x32xf32>
    %c0_96 = arith.constant 0 : index
    %c0_97 = arith.constant 0 : index
    %287 = vector.load %arg16[%c0_96, %c0_97] : memref<1x32xf32, #tpu.memory_space<vmem>>, vector<1x32xf32>
    %cst_98 = arith.constant dense<0.000000e+00> : vector<16xf32>
    %288 = vector.multi_reduction <add>, %285, %cst_98 [1] : vector<16x32xf32> to vector<16xf32>
    %289 = vector.shape_cast %288 : vector<16xf32> to vector<16x1xf32>
    %cst_99 = arith.constant 3.200000e+01 : f32
    %290 = vector.broadcast %cst_99 : f32 to vector<16x1xf32>
    %291 = arith.divf %289, %290 : vector<16x1xf32>
    %292 = vector.broadcast %291 : vector<16x1xf32> to vector<16x32xf32>
    %293 = arith.subf %285, %292 : vector<16x32xf32>
    %294 = arith.mulf %293, %293 : vector<16x32xf32>
    %cst_100 = arith.constant dense<0.000000e+00> : vector<16xf32>
    %295 = vector.multi_reduction <add>, %294, %cst_100 [1] : vector<16x32xf32> to vector<16xf32>
    %296 = vector.shape_cast %295 : vector<16xf32> to vector<16x1xf32>
    %cst_101 = arith.constant 3.200000e+01 : f32
    %297 = vector.broadcast %cst_101 : f32 to vector<16x1xf32>
    %298 = arith.divf %296, %297 : vector<16x1xf32>
    %299 = vector.broadcast %291 : vector<16x1xf32> to vector<16x32xf32>
    %300 = arith.subf %285, %299 : vector<16x32xf32>
    %cst_102 = arith.constant 9.99999974E-6 : f32
    %301 = vector.broadcast %cst_102 : f32 to vector<16x1xf32>
    %302 = arith.addf %298, %301 : vector<16x1xf32>
    %303 = math.rsqrt %302 : vector<16x1xf32>
    %304 = vector.broadcast %303 : vector<16x1xf32> to vector<16x32xf32>
    %305 = arith.mulf %300, %304 : vector<16x32xf32>
    %306 = vector.broadcast %286 : vector<1x32xf32> to vector<16x32xf32>
    %307 = arith.mulf %305, %306 : vector<16x32xf32>
    %308 = vector.broadcast %287 : vector<1x32xf32> to vector<16x32xf32>
    %309 = arith.addf %307, %308 : vector<16x32xf32>
    %310 = arith.truncf %309 : vector<16x32xf32> to vector<16x32xbf16>
    %c0_103 = arith.constant 0 : index
    %c0_104 = arith.constant 0 : index
    %311 = vector.load %arg17[%c0_103, %c0_104] : memref<32x64xbf16, #tpu.memory_space<vmem>>, vector<32x64xbf16>
    %cst_105 = arith.constant dense<0.000000e+00> : vector<16x64xf32>
    %312 = tpu.matmul %310, %311, %cst_105 {dimension_numbers = #tpu.dot_dimension_numbers<[1], [0], [0], [1], [0, 0, 1, 1], [], []>} : vector<16x32xbf16>, vector<32x64xbf16>, vector<16x64xf32> -> vector<16x64xf32>
    %c0_106 = arith.constant 0 : index
    %c0_107 = arith.constant 0 : index
    %313 = vector.load %arg18[%c0_106, %c0_107] : memref<1x64xf32, #tpu.memory_space<vmem>>, vector<1x64xf32>
    %314 = vector.broadcast %313 : vector<1x64xf32> to vector<16x64xf32>
    %315 = arith.addf %312, %314 : vector<16x64xf32>
    %cst_108 = arith.constant 5.000000e-01 : f32
    %316 = vector.broadcast %cst_108 : f32 to vector<16x64xf32>
    %317 = arith.mulf %316, %315 : vector<16x64xf32>
    %cst_109 = arith.constant 0.707106769 : f32
    %318 = vector.broadcast %cst_109 : f32 to vector<16x64xf32>
    %319 = arith.mulf %315, %318 : vector<16x64xf32>
    %320 = math.erf %319 : vector<16x64xf32>
    %cst_110 = arith.constant 1.000000e+00 : f32
    %321 = vector.broadcast %cst_110 : f32 to vector<16x64xf32>
    %322 = arith.addf %321, %320 : vector<16x64xf32>
    %323 = arith.mulf %317, %322 : vector<16x64xf32>
    %324 = arith.truncf %323 : vector<16x64xf32> to vector<16x64xbf16>
    %c0_111 = arith.constant 0 : index
    %c0_112 = arith.constant 0 : index
    %325 = vector.load %arg19[%c0_111, %c0_112] : memref<64x128xbf16, #tpu.memory_space<vmem>>, vector<64x128xbf16>
    %cst_113 = arith.constant dense<0.000000e+00> : vector<16x128xf32>
    %326 = tpu.matmul %324, %325, %cst_113 {dimension_numbers = #tpu.dot_dimension_numbers<[1], [0], [0], [1], [0, 0, 1, 1], [], []>} : vector<16x64xbf16>, vector<64x128xbf16>, vector<16x128xf32> -> vector<16x128xf32>
    %c0_114 = arith.constant 0 : index
    %c0_115 = arith.constant 0 : index
    %327 = vector.load %arg20[%c0_114, %c0_115] : memref<1x128xf32, #tpu.memory_space<vmem>>, vector<1x128xf32>
    %328 = vector.broadcast %327 : vector<1x128xf32> to vector<16x128xf32>
    %329 = arith.addf %326, %328 : vector<16x128xf32>
    %c0_116 = arith.constant 0 : index
    %c0_117 = arith.constant 0 : index
    %330 = vector.load %arg21[%c0_116, %c0_117] : memref<16x128xf32, #tpu.memory_space<vmem>>, vector<16x128xf32>
    tpu.vector_store %arg21[%c0_116, %c0_117], %329 {strides = array<i32>} : memref<16x128xf32, #tpu.memory_space<vmem>>, vector<16x128xf32>,
    return
  }
}

</mosaic_0001>

<llo_original>
// kernel: transformer_forward.1
$region0: #{transformer_forward.1}
  #allocation0 [shape = 'u32[]', space=smem, size = 0x4, offset = 0x4, fixed_abs, tag = 'smem constant byte address 0x4 - core index']
  #allocation1 [shape = 'u32[72,128]{1,0:T(1,128)}', space=vmem, size = 0x9000, scoped, tag = 'internal scratch']
  %s0 = inlined_call_operand.vmem [shape: f32[16,32], index: 0, kind: input, shape index: {}]
  %s1 = inlined_call_operand.hbm [shape: f32[1,32], index: 1, kind: input, shape index: {}]
  %s2 = inlined_call_operand.hbm [shape: f32[1,32], index: 2, kind: input, shape index: {}]
  %s3 = inlined_call_operand.vmem [shape: bf16[32,96], index: 3, kind: input, shape index: {}]
  %s4 = inlined_call_operand.hbm [shape: bf16[32,32], index: 4, kind: input, shape index: {}]
  %s5 = inlined_call_operand.hbm [shape: f32[1,32], index: 5, kind: input, shape index: {}]
  %s6 = inlined_call_operand.hbm [shape: f32[1,32], index: 6, kind: input, shape index: {}]
  %s7 = inlined_call_operand.hbm [shape: bf16[32,64], index: 7, kind: input, shape index: {}]
  %s8 = inlined_call_operand.hbm [shape: f32[1,64], index: 8, kind: input, shape index: {}]
  %s9 = inlined_call_operand.vmem [shape: bf16[64,32], index: 9, kind: input, shape index: {}]
  %s10 = inlined_call_operand.hbm [shape: f32[1,32], index: 10, kind: input, shape index: {}]
  %s11 = inlined_call_operand.hbm [shape: f32[1,32], index: 11, kind: input, shape index: {}]
  %s12 = inlined_call_operand.hbm [shape: f32[1,32], index: 12, kind: input, shape index: {}]
  %s13 = inlined_call_operand.hbm [shape: bf16[32,96], index: 13, kind: input, shape index: {}]
  %s14 = inlined_call_operand.hbm [shape: bf16[32,32], index: 14, kind: input, shape index: {}]
  %s15 = inlined_call_operand.hbm [shape: f32[1,32], index: 15, kind: input, shape index: {}]
  %s16 = inlined_call_operand.hbm [shape: f32[1,32], index: 16, kind: input, shape index: {}]
  %s17 = inlined_call_operand.hbm [shape: bf16[32,64], index: 17, kind: input, shape index: {}]
  %s18 = inlined_call_operand.vmem [shape: f32[1,64], index: 18, kind: input, shape index: {}]
  %s19 = inlined_call_operand.vmem [shape: bf16[64,128], index: 19, kind: input, shape index: {}]
  %s20 = inlined_call_operand.vmem [shape: f32[1,128], index: 20, kind: input, shape index: {}]
  %s21 = inlined_call_operand.vmem [shape: f32[16,128], index: 21, kind: output, shape index: {}]
  %s22 = sld [smem:[#allocation0]]
  $region154: #{transformer_forward.1} parent=0
    _
  %s24 = ssub.s32 1, %s22
  %s25 = scalar_select 0, %s24, %s22
  $region1: #{transformer_forward.1} parent=0
    #allocation2 [shape = 'u8[512]{0}', space=vmem, size = 0x400, scoped, tag = 'input window, operand 1, single buffered']
    #allocation3 [shape = 's32[1]{0}', space=sflag, size = 0x4, scoped, tag = 'scoped memory for transformer_forward.1']
    #allocation4 [shape = 'u8[512]{0}', space=vmem, size = 0x400, scoped, tag = 'input window, operand 2, single buffered']
    #allocation5 [shape = 's32[1]{0}', space=sflag, size = 0x4, scoped, tag = 'scoped memory for transformer_forward.1']
    #allocation6 [shape = 'u8[8192]{0}', space=vmem, size = 0x2000, scoped, tag = 'input window, operand 4, single buffered']
    #allocation7 [shape = 'u8[512]{0}', space=vmem, size = 0x400, scoped, tag = 'input window, operand 5, single buffered']
    #allocation8 [shape = 's32[1]{0}', space=sflag, size = 0x4, scoped, tag = 'scoped memory for transformer_forward.1']
    #allocation9 [shape = 'u8[512]{0}', space=vmem, size = 0x400, scoped, tag = 'input window, operand 6, single buffered']
    #allocation10 [shape = 'u8[8192]{0}', space=vmem, size = 0x2000, scoped, tag = 'input window, operand 7, single buffered']
    #allocation11 [shape = 's32[1]{0}', space=sflag, size = 0x4, scoped, tag = 'scoped memory for transformer_forward.1']
    #allocation12 [shape = 'u8[512]{0}', space=vmem, size = 0x400, scoped, tag = 'input window, operand 8, single buffered']
    #allocation13 [shape = 'u8[512]{0}', space=vmem, size = 0x400, scoped, tag = 'input window, operand 10, single buffered']
    #allocation14 [shape = 's32[1]{0}', space=sflag, size = 0x4, scoped, tag = 'scoped memory for transformer_forward.1']
    #allocation15 [shape = 'u8[512]{0}', space=vmem, size = 0x400, scoped, tag = 'input window, operand 11, single buffered']
    #allocation16 [shape = 'u8[512]{0}', space=vmem, size = 0x400, scoped, tag = 'input window, operand 12, single buffered']
    #allocation17 [shape = 's32[1]{0}', space=sflag, size = 0x4, scoped, tag = 'scoped memory for transformer_forward.1']
    #allocation18 [shape = 'u8[8192]{0}', space=vmem, size = 0x2000, scoped, tag = 'input window, operand 13, single buffered']
    #allocation19 [shape = 'u8[8192]{0}', space=vmem, size = 0x2000, scoped, tag = 'input window, operand 14, single buffered']
    #allocation20 [shape = 's32[1]{0}', space=sflag, size = 0x4, scoped, tag = 'scoped memory for transformer_forward.1']
    #allocation21 [shape = 'u8[512]{0}', space=vmem, size = 0x400, scoped, tag = 'input window, operand 15, single buffered']
    #allocation22 [shape = 'u8[512]{0}', space=vmem, size = 0x400, scoped, tag = 'input window, operand 16, single buffered']
    #allocation23 [shape = 's32[1]{0}', space=sflag, size = 0x4, scoped, tag = 'scoped memory for transformer_forward.1']
    #allocation24 [shape = 'u8[8192]{0}', space=vmem, size = 0x2000, scoped, tag = 'input window, operand 17, single buffered']
    %26 = vsyncpa [#allocation3], 0
    %27 = vsyncpa [#allocation5], 0
    %28 = vsyncpa [#allocation8], 0
    %29 = vsyncpa [#allocation11], 0
    %30 = vsyncpa [#allocation14], 0
    %31 = vsyncpa [#allocation17], 0
    %32 = vsyncpa [#allocation20], 0
    %33 = vsyncpa [#allocation23], 0
    // Predicated region
    $region2: #{transformer_forward.1} parent=1 // pred_check
      _
    $region3: #{transformer_forward.1} parent=1 // pred_check_branch
      %35 = sbr.rel (0) target = $region5
    $region4: #{transformer_forward.1} parent=1 // pred_region
      _
    $region5: #{transformer_forward.1} parent=1 // pred_fallthru
      _
    // Predicated region
    $region6: #{transformer_forward.1} parent=1 // pred_check
      _
    $region7: #{transformer_forward.1} parent=1 // pred_check_branch
      %37 = sbr.rel (0) target = $region9
    $region8: #{transformer_forward.1} parent=1 // pred_region
      %39 = vsyncadd [#allocation3], 0
      %s41 = sshll.u32 %s1, 4
      %s42 = int_to_ptr.hbm [resolvable:$true] %s41
      %s43 = sshll.u32 [#allocation2], 4
      %s44 = int_to_ptr.vmem [resolvable:$true] %s43
      %46 = dma.hbm_to_vmem [thread:$0]  %s42, 16, %s44, [#allocation3]
    $region9: #{transformer_forward.1} parent=1 // pred_fallthru
      _
    // Predicated region
    $region10: #{transformer_forward.1} parent=1 // pred_check
      _
    $region11: #{transformer_forward.1} parent=1 // pred_check_branch
      %48 = sbr.rel (0) target = $region13
    $region12: #{transformer_forward.1} parent=1 // pred_region
      %50 = vsyncadd [#allocation5], 0
      %s52 = sshll.u32 %s2, 4
      %s53 = int_to_ptr.hbm [resolvable:$true] %s52
      %s54 = sshll.u32 [#allocation4], 4
      %s55 = int_to_ptr.vmem [resolvable:$true] %s54
      %57 = dma.hbm_to_vmem [thread:$0]  %s53, 16, %s55, [#allocation5]
    $region13: #{transformer_forward.1} parent=1 // pred_fallthru
      _
    // Predicated region
    $region14: #{transformer_forward.1} parent=1 // pred_check
      _
    $region15: #{transformer_forward.1} parent=1 // pred_check_branch
      %59 = sbr.rel (0) target = $region17
    $region16: #{transformer_forward.1} parent=1 // pred_region
      _
    $region17: #{transformer_forward.1} parent=1 // pred_fallthru
      _
    // Predicated region
    $region18: #{transformer_forward.1} parent=1 // pred_check
      _
    $region19: #{transformer_forward.1} parent=1 // pred_check_branch
      %61 = sbr.rel (0) target = $region21
    $region20: #{transformer_forward.1} parent=1 // pred_region
      %63 = vsyncadd [#allocation5], 0
      %s64 = sshll.u32 %s4, 4
      %s65 = int_to_ptr.hbm [resolvable:$true] %s64
      %s66 = sshll.u32 [#allocation6], 4
      %s67 = int_to_ptr.vmem [resolvable:$true] %s66
      %72 = dma.hbm_to_vmem [thread:$0]  %s65, 256, %s67, [#allocation5], 64, 64, 4
    $region21: #{transformer_forward.1} parent=1 // pred_fallthru
      _
    // Predicated region
    $region22: #{transformer_forward.1} parent=1 // pred_check
      _
    $region23: #{transformer_forward.1} parent=1 // pred_check_branch
      %74 = sbr.rel (0) target = $region25
    $region24: #{transformer_forward.1} parent=1 // pred_region
      %76 = vsyncadd [#allocation8], 0
      %s78 = sshll.u32 %s5, 4
      %s79 = int_to_ptr.hbm [resolvable:$true] %s78
      %s80 = sshll.u32 [#allocation7], 4
      %s81 = int_to_ptr.vmem [resolvable:$true] %s80
      %83 = dma.hbm_to_vmem [thread:$0]  %s79, 16, %s81, [#allocation8]
    $region25: #{transformer_forward.1} parent=1 // pred_fallthru
      _
    // Predicated region
    $region26: #{transformer_forward.1} parent=1 // pred_check
      _
    $region27: #{transformer_forward.1} parent=1 // pred_check_branch
      %85 = sbr.rel (0) target = $region29
    $region28: #{transformer_forward.1} parent=1 // pred_region
      %87 = vsyncadd [#allocation8], 0
      %s89 = sshll.u32 %s6, 4
      %s90 = int_to_ptr.hbm [resolvable:$true] %s89
      %s91 = sshll.u32 [#allocation9], 4
      %s92 = int_to_ptr.vmem [resolvable:$true] %s91
      %94 = dma.hbm_to_vmem [thread:$0]  %s90, 16, %s92, [#allocation8]
    $region29: #{transformer_forward.1} parent=1 // pred_fallthru
      _
    // Predicated region
    $region30: #{transformer_forward.1} parent=1 // pred_check
      _
    $region31: #{transformer_forward.1} parent=1 // pred_check_branch
      %96 = sbr.rel (0) target = $region33
    $region32: #{transformer_forward.1} parent=1 // pred_region
      %98 = vsyncadd [#allocation11], 0
      %s99 = sshll.u32 %s7, 4
      %s100 = int_to_ptr.hbm [resolvable:$true] %s99
      %s101 = sshll.u32 [#allocation10], 4
      %s102 = int_to_ptr.vmem [resolvable:$true] %s101
      %107 = dma.hbm_to_vmem [thread:$0]  %s100, 256, %s102, [#allocation11], 64, 64, 4
    $region33: #{transformer_forward.1} parent=1 // pred_fallthru
      _
    // Predicated region
    $region34: #{transformer_forward.1} parent=1 // pred_check
      _
    $region35: #{transformer_forward.1} parent=1 // pred_check_branch
      %109 = sbr.rel (0) target = $region37
    $region36: #{transformer_forward.1} parent=1 // pred_region
      %111 = vsyncadd [#allocation11], 0
      %s113 = sshll.u32 %s8, 4
      %s114 = int_to_ptr.hbm [resolvable:$true] %s113
      %s115 = sshll.u32 [#allocation12], 4
      %s116 = int_to_ptr.vmem [resolvable:$true] %s115
      %118 = dma.hbm_to_vmem [thread:$0]  %s114, 16, %s116, [#allocation11]
    $region37: #{transformer_forward.1} parent=1 // pred_fallthru
      _
    // Predicated region
    $region38: #{transformer_forward.1} parent=1 // pred_check
      _
    $region39: #{transformer_forward.1} parent=1 // pred_check_branch
      %120 = sbr.rel (0) target = $region41
    $region40: #{transformer_forward.1} parent=1 // pred_region
      _
    $region41: #{transformer_forward.1} parent=1 // pred_fallthru
      _
    // Predicated region
    $region42: #{transformer_forward.1} parent=1 // pred_check
      _
    $region43: #{transformer_forward.1} parent=1 // pred_check_branch
      %122 = sbr.rel (0) target = $region45
    $region44: #{transformer_forward.1} parent=1 // pred_region
      %124 = vsyncadd [#allocation14], 0
      %s126 = sshll.u32 %s10, 4
      %s127 = int_to_ptr.hbm [resolvable:$true] %s126
      %s128 = sshll.u32 [#allocation13], 4
      %s129 = int_to_ptr.vmem [resolvable:$true] %s128
      %131 = dma.hbm_to_vmem [thread:$0]  %s127, 16, %s129, [#allocation14]
    $region45: #{transformer_forward.1} parent=1 // pred_fallthru
      _
    // Predicated region
    $region46: #{transformer_forward.1} parent=1 // pred_check
      _
    $region47: #{transformer_forward.1} parent=1 // pred_check_branch
      %133 = sbr.rel (0) target = $region49
    $region48: #{transformer_forward.1} parent=1 // pred_region
      %135 = vsyncadd [#allocation14], 0
      %s137 = sshll.u32 %s11, 4
      %s138 = int_to_ptr.hbm [resolvable:$true] %s137
      %s139 = sshll.u32 [#allocation15], 4
      %s140 = int_to_ptr.vmem [resolvable:$true] %s139
      %142 = dma.hbm_to_vmem [thread:$0]  %s138, 16, %s140, [#allocation14]
    $region49: #{transformer_forward.1} parent=1 // pred_fallthru
      _
    // Predicated region
    $region50: #{transformer_forward.1} parent=1 // pred_check
      _
    $region51: #{transformer_forward.1} parent=1 // pred_check_branch
      %144 = sbr.rel (0) target = $region53
    $region52: #{transformer_forward.1} parent=1 // pred_region
      %146 = vsyncadd [#allocation17], 0
      %s148 = sshll.u32 %s12, 4
      %s149 = int_to_ptr.hbm [resolvable:$true] %s148
      %s150 = sshll.u32 [#allocation16], 4
      %s151 = int_to_ptr.vmem [resolvable:$true] %s150
      %153 = dma.hbm_to_vmem [thread:$0]  %s149, 16, %s151, [#allocation17]
    $region53: #{transformer_forward.1} parent=1 // pred_fallthru
      _
    // Predicated region
    $region54: #{transformer_forward.1} parent=1 // pred_check
      _
    $region55: #{transformer_forward.1} parent=1 // pred_check_branch
      %155 = sbr.rel (0) target = $region57
    $region56: #{transformer_forward.1} parent=1 // pred_region
      %157 = vsyncadd [#allocation17], 0
      %s158 = sshll.u32 %s13, 4
      %s159 = int_to_ptr.hbm [resolvable:$true] %s158
      %s160 = sshll.u32 [#allocation18], 4
      %s161 = int_to_ptr.vmem [resolvable:$true] %s160
      %166 = dma.hbm_to_vmem [thread:$0]  %s159, 256, %s161, [#allocation17], 64, 64, 4
    $region57: #{transformer_forward.1} parent=1 // pred_fallthru
      _
    // Predicated region
    $region58: #{transformer_forward.1} parent=1 // pred_check
      _
    $region59: #{transformer_forward.1} parent=1 // pred_check_branch
      %168 = sbr.rel (0) target = $region61
    $region60: #{transformer_forward.1} parent=1 // pred_region
      %170 = vsyncadd [#allocation20], 0
      %s171 = sshll.u32 %s14, 4
      %s172 = int_to_ptr.hbm [resolvable:$true] %s171
      %s173 = sshll.u32 [#allocation19], 4
      %s174 = int_to_ptr.vmem [resolvable:$true] %s173
      %179 = dma.hbm_to_vmem [thread:$0]  %s172, 256, %s174, [#allocation20], 64, 64, 4
    $region61: #{transformer_forward.1} parent=1 // pred_fallthru
      _
    // Predicated region
    $region62: #{transformer_forward.1} parent=1 // pred_check
      _
    $region63: #{transformer_forward.1} parent=1 // pred_check_branch
      %181 = sbr.rel (0) target = $region65
    $region64: #{transformer_forward.1} parent=1 // pred_region
      %183 = vsyncadd [#allocation20], 0
      %s185 = sshll.u32 %s15, 4
      %s186 = int_to_ptr.hbm [resolvable:$true] %s185
      %s187 = sshll.u32 [#allocation21], 4
      %s188 = int_to_ptr.vmem [resolvable:$true] %s187
      %190 = dma.hbm_to_vmem [thread:$0]  %s186, 16, %s188, [#allocation20]
    $region65: #{transformer_forward.1} parent=1 // pred_fallthru
      _
    // Predicated region
    $region66: #{transformer_forward.1} parent=1 // pred_check
      _
    $region67: #{transformer_forward.1} parent=1 // pred_check_branch
      %192 = sbr.rel (0) target = $region69
    $region68: #{transformer_forward.1} parent=1 // pred_region
      %194 = vsyncadd [#allocation23], 0
      %s196 = sshll.u32 %s16, 4
      %s197 = int_to_ptr.hbm [resolvable:$true] %s196
      %s198 = sshll.u32 [#allocation22], 4
      %s199 = int_to_ptr.vmem [resolvable:$true] %s198
      %201 = dma.hbm_to_vmem [thread:$0]  %s197, 16, %s199, [#allocation23]
    $region69: #{transformer_forward.1} parent=1 // pred_fallthru
      _
    // Predicated region
    $region70: #{transformer_forward.1} parent=1 // pred_check
      _
    $region71: #{transformer_forward.1} parent=1 // pred_check_branch
      %203 = sbr.rel (0) target = $region73
    $region72: #{transformer_forward.1} parent=1 // pred_region
      %205 = vsyncadd [#allocation23], 0
      %s206 = sshll.u32 %s17, 4
      %s207 = int_to_ptr.hbm [resolvable:$true] %s206
      %s208 = sshll.u32 [#allocation24], 4
      %s209 = int_to_ptr.vmem [resolvable:$true] %s208
      %214 = dma.hbm_to_vmem [thread:$0]  %s207, 256, %s209, [#allocation23], 64, 64, 4
    $region73: #{transformer_forward.1} parent=1 // pred_fallthru
      _
    // Predicated region
    $region74: #{transformer_forward.1} parent=1 // pred_check
      _
    $region75: #{transformer_forward.1} parent=1 // pred_check_branch
      %216 = sbr.rel (0) target = $region77
    $region76: #{transformer_forward.1} parent=1 // pred_region
      _
    $region77: #{transformer_forward.1} parent=1 // pred_fallthru
      _
    // Predicated region
    $region78: #{transformer_forward.1} parent=1 // pred_check
      _
    $region79: #{transformer_forward.1} parent=1 // pred_check_branch
      %218 = sbr.rel (0) target = $region81
    $region80: #{transformer_forward.1} parent=1 // pred_region
      _
    $region81: #{transformer_forward.1} parent=1 // pred_fallthru
      _
    // Predicated region
    $region82: #{transformer_forward.1} parent=1 // pred_check
      _
    $region83: #{transformer_forward.1} parent=1 // pred_check_branch
      %220 = sbr.rel (0) target = $region85
    $region84: #{transformer_forward.1} parent=1 // pred_region
      _
    $region85: #{transformer_forward.1} parent=1 // pred_fallthru
      _
    // Predicated region
    $region86: #{transformer_forward.1} parent=1 // pred_check
      _
    $region87: #{transformer_forward.1} parent=1 // pred_check_branch
      %222 = sbr.rel (0) target = $region89
    $region88: #{transformer_forward.1} parent=1 // pred_region
      %224 = dma.done [#allocation3], 16
    $region89: #{transformer_forward.1} parent=1 // pred_fallthru
      _
    // Predicated region
    $region90: #{transformer_forward.1} parent=1 // pred_check
      _
    $region91: #{transformer_forward.1} parent=1 // pred_check_branch
      %226 = sbr.rel (0) target = $region93
    $region92: #{transformer_forward.1} parent=1 // pred_region
      %228 = dma.done [#allocation5], 16
    $region93: #{transformer_forward.1} parent=1 // pred_fallthru
      _
    // Predicated region
    $region94: #{transformer_forward.1} parent=1 // pred_check
      _
    $region95: #{transformer_forward.1} parent=1 // pred_check_branch
      %230 = sbr.rel (0) target = $region97
    $region96: #{transformer_forward.1} parent=1 // pred_region
      %232 = dma.done [#allocation5], 256
    $region97: #{transformer_forward.1} parent=1 // pred_fallthru
      _
    // Predicated region
    $region98: #{transformer_forward.1} parent=1 // pred_check
      _
    $region99: #{transformer_forward.1} parent=1 // pred_check_branch
      %234 = sbr.rel (0) target = $region101
    $region100: #{transformer_forward.1} parent=1 // pred_region
      %236 = dma.done [#allocation8], 16
    $region101: #{transformer_forward.1} parent=1 // pred_fallthru
      _
    // Predicated region
    $region102: #{transformer_forward.1} parent=1 // pred_check
      _
    $region103: #{transformer_forward.1} parent=1 // pred_check_branch
      %238 = sbr.rel (0) target = $region105
    $region104: #{transformer_forward.1} parent=1 // pred_region
      %240 = dma.done [#allocation8], 16
    $region105: #{transformer_forward.1} parent=1 // pred_fallthru
      _
    // Predicated region
    $region106: #{transformer_forward.1} parent=1 // pred_check
      _
    $region107: #{transformer_forward.1} parent=1 // pred_check_branch
      %242 = sbr.rel (0) target = $region109
    $region108: #{transformer_forward.1} parent=1 // pred_region
      %244 = dma.done [#allocation11], 256
    $region109: #{transformer_forward.1} parent=1 // pred_fallthru
      _
    // Predicated region
    $region110: #{transformer_forward.1} parent=1 // pred_check
      _
    $region111: #{transformer_forward.1} parent=1 // pred_check_branch
      %246 = sbr.rel (0) target = $region113
    $region112: #{transformer_forward.1} parent=1 // pred_region
      %248 = dma.done [#allocation11], 16
    $region113: #{transformer_forward.1} parent=1 // pred_fallthru
      _
    // Predicated region
    $region114: #{transformer_forward.1} parent=1 // pred_check
      _
    $region115: #{transformer_forward.1} parent=1 // pred_check_branch
      %250 = sbr.rel (0) target = $region117
    $region116: #{transformer_forward.1} parent=1 // pred_region
      %252 = dma.done [#allocation14], 16
    $region117: #{transformer_forward.1} parent=1 // pred_fallthru
      _
    // Predicated region
    $region118: #{transformer_forward.1} parent=1 // pred_check
      _
    $region119: #{transformer_forward.1} parent=1 // pred_check_branch
      %254 = sbr.rel (0) target = $region121
    $region120: #{transformer_forward.1} parent=1 // pred_region
      %256 = dma.done [#allocation14], 16
    $region121: #{transformer_forward.1} parent=1 // pred_fallthru
      _
    // Predicated region
    $region122: #{transformer_forward.1} parent=1 // pred_check
      _
    $region123: #{transformer_forward.1} parent=1 // pred_check_branch
      %258 = sbr.rel (0) target = $region125
    $region124: #{transformer_forward.1} parent=1 // pred_region
      %260 = dma.done [#allocation17], 16
    $region125: #{transformer_forward.1} parent=1 // pred_fallthru
      _
    // Predicated region
    $region126: #{transformer_forward.1} parent=1 // pred_check
      _
    $region127: #{transformer_forward.1} parent=1 // pred_check_branch
      %262 = sbr.rel (0) target = $region129
    $region128: #{transformer_forward.1} parent=1 // pred_region
      %264 = dma.done [#allocation17], 256
    $region129: #{transformer_forward.1} parent=1 // pred_fallthru
      _
    // Predicated region
    $region130: #{transformer_forward.1} parent=1 // pred_check
      _
    $region131: #{transformer_forward.1} parent=1 // pred_check_branch
      %266 = sbr.rel (0) target = $region133
    $region132: #{transformer_forward.1} parent=1 // pred_region
      %268 = dma.done [#allocation20], 256
    $region133: #{transformer_forward.1} parent=1 // pred_fallthru
      _
    // Predicated region
    $region134: #{transformer_forward.1} parent=1 // pred_check
      _
    $region135: #{transformer_forward.1} parent=1 // pred_check_branch
      %270 = sbr.rel (0) target = $region137
    $region136: #{transformer_forward.1} parent=1 // pred_region
      %272 = dma.done [#allocation20], 16
    $region137: #{transformer_forward.1} parent=1 // pred_fallthru
      _
    // Predicated region
    $region138: #{transformer_forward.1} parent=1 // pred_check
      _
    $region139: #{transformer_forward.1} parent=1 // pred_check_branch
      %274 = sbr.rel (0) target = $region141
    $region140: #{transformer_forward.1} parent=1 // pred_region
      %276 = dma.done [#allocation23], 16
    $region141: #{transformer_forward.1} parent=1 // pred_fallthru
      _
    // Predicated region
    $region142: #{transformer_forward.1} parent=1 // pred_check
      _
    $region143: #{transformer_forward.1} parent=1 // pred_check_branch
      %278 = sbr.rel (0) target = $region145
    $region144: #{transformer_forward.1} parent=1 // pred_region
      %280 = dma.done [#allocation23], 256
    $region145: #{transformer_forward.1} parent=1 // pred_fallthru
      _
    %v282 = vld [vmem:[%s0] sm:$0xff]
    %v283 = vld [vmem:[%s0 + $0x8] sm:$0xff]
    %v284 = vlaneseq
    %v285 = vshrl.u32 %v284, 7
    %v286 = vadd.s32 %v285, 8
    %v287 = vcvt.s32.f32 %v285
    %v288 = vcvt.s32.f32 %v286
    %v289 = vlaneseq
    %v290 = vand.u32 %v289, 127
    %v291 = vcvt.s32.f32 %v290
    %v292 = vmul.f32 %v287, 0.125
    %v293 = vmul.f32 %v288, 0.125
    %v294 = vfloor.f32 %v292
    %v295 = vfloor.f32 %v293
    %v296 = vmul.f32 %v291, 0.125
    %v297 = vfloor.f32 %v296
    %vm298 = vcmp.eq.f32.partialorder %v294, %v297
    %vm299 = vcmp.eq.f32.partialorder %v295, %v297
    %v300 = vsel %vm298, 0.0, -1e+09
    %v301 = vsel %vm299, 0.0, -1e+09
    %v302 = vld [vmem:[#allocation2] sm:$0x1]
    %v303 = vld [vmem:[#allocation4] sm:$0x1]
    %vm304 = vcmask 261120
    %v305 = vsel %vm304, %v282, 0.0
    %306 = vadd.xlane.f32.xlu0 %v305
    %v307 = vpop.xlane.xlu0 %306
    %v308 = vsel %vm304, %v283, 0.0
    %309 = vadd.xlane.f32.xlu0 %v308
    %v310 = vpop.xlane.xlu0 %309
    %v311 = vrcp.pop 32.0
    %v312 = vmul.f32 32.0, %v311
    %v313 = vsub.f32 1.0, %v312
    %v314 = vmul.f32 %v311, %v313
    %v315 = vadd.f32 %v311, %v314
    %vm316 = vweird.f32 %v311
    %v317 = vsel %vm316, %v311, %v315
    %v318 = vmul.f32 %v307, %v317
    %v319 = vmul.f32 %v310, %v317
    %v320 = vsub.f32 %v282, %v318
    %v321 = vsub.f32 %v283, %v319
    %v322 = vmul.f32 %v320, %v320
    %v323 = vmul.f32 %v321, %v321
    %v324 = vsel %vm304, %v322, 0.0
    %325 = vadd.xlane.f32.xlu0 %v324
    %v326 = vpop.xlane.xlu0 %325
    %v327 = vsel %vm304, %v323, 0.0
    %328 = vadd.xlane.f32.xlu0 %v327
    %v329 = vpop.xlane.xlu0 %328
    %v330 = vmul.f32 %v326, %v317
    %v331 = vmul.f32 %v329, %v317
    %v332 = vadd.f32 %v330, 1e-05
    %v333 = vadd.f32 %v331, 1e-05
    %v334 = vrsqrt.pop %v332
    %v335 = vmul.f32 %v334, %v332
    %v336 = vmul.f32 %v335, %v334
    %v337 = vmul.f32 0.5, %v336
    %v338 = vsub.f32 1.5, %v337
    %v339 = vmul.f32 %v334, %v338
    %vm340 = vweird.f32 %v332
    %vm341 = vweird.f32 %v334
    %vm342 = vmor %vm340, %vm341
    %v343 = vsel %vm342, %v334, %v339
    %v344 = vrsqrt.pop %v333
    %v345 = vmul.f32 %v344, %v333
    %v346 = vmul.f32 %v345, %v344
    %v347 = vmul.f32 0.5, %v346
    %v348 = vsub.f32 1.5, %v347
    %v349 = vmul.f32 %v344, %v348
    %vm350 = vweird.f32 %v333
    %vm351 = vweird.f32 %v344
    %vm352 = vmor %vm350, %vm351
    %v353 = vsel %vm352, %v344, %v349
    %v354 = vmul.f32 %v320, %v343
    %v355 = vmul.f32 %v321, %v353
    %v357 = vperm.slane %v302, 0
    %v359 = vmul.f32 %v354, %v357
    %v360 = vmul.f32 %v355, %v357
    %v362 = vperm.slane %v303, 0
    %v364 = vadd.f32 %v359, %v362
    %v365 = vadd.f32 %v360, %v362
    %v366 = vpack.c.bf16 %v365, %v364
    %v367 = vld [vmem:[%s3] sm:$0xf]
    %v368 = vld [vmem:[%s3 + $0x4] sm:$0xf]
    %v369 = vld [vmem:[%s3 + $0x8] sm:$0xf]
    %v370 = vld [vmem:[%s3 + $0xc] sm:$0xf]
    %v375 = vunpack.c.l.b16 %v367
    %v376 = vunpack.c.l.b16 %v368
    %v377 = vunpack.c.l.b16 %v369
    %v378 = vunpack.c.l.b16 %v370
    %v379 = vpack.c.b16 %v376, %v375
    %v380 = vpack.c.b16 %v378, %v377
    %v384 = vsel %vm304, %v366, 0
    %386 = vmatpush.bf16.msra.mxu0 0
    %387 = vmatpush.bf16.msra.mxu0 0
    %388 = vmatpush.bf16.msra.mxu0 0
    %389 = vmatpush.bf16.msra.mxu0 0
    %390 = vmatpush.bf16.msra.mxu0 0
    %391 = vmatpush.bf16.msra.mxu0 0
    %392 = vmatpush.bf16.msra.mxu0 %v380
    %393 = vmatpush.bf16.msra.mxu0 %v379
    %394 = vmatmul.bf16.gmra.mxu0 %v384
    %v395 = vpop.f32.mrf.mxu0
    %v396 = vadd.f32 0.0, %v395
    %v397 = vpop.f32.mrf.mxu0
    %v398 = vadd.f32 0.0, %v397
    %399 = vdwg.mxu0
    %v400 = vpack.c.bf16 %v396, %v396
    %v401 = vpack.c.bf16 %v398, %v398
    %v404 = vunpack.c.l.b16 %v400
    %v405 = vunpack.c.l.b16 %v401
    %v406 = vpack.c.b16 %v405, %v404
    %407 = vrot.lane.b32.xlu0 %v406, 96
    %v408 = vpop.permute.xlu0 %407
    %vm409 = vcmask 64512
    %v411 = vsel %vm409, %v406, 0
    %v414 = vsel %vm409, %v408, 0
    %416 = vmatpush.bf16.xpose.msra.mxu0 0
    %417 = vmatpush.bf16.xpose.msra.mxu0 0
    %418 = vmatpush.bf16.xpose.msra.mxu0 0
    %419 = vmatpush.bf16.xpose.msra.mxu0 0
    %420 = vmatpush.bf16.xpose.msra.mxu0 0
    %421 = vmatpush.bf16.xpose.msra.mxu0 0
    %422 = vmatpush.bf16.xpose.msra.mxu0 0
    %423 = vmatpush.bf16.xpose.msra.mxu0 %v414
    %424 = vmatmul.bf16.gmra.mxu0 %v411
    %v425 = vpop.f32.mrf.mxu0
    %v426 = vadd.f32 %v300, %v425
    %v427 = vpop.f32.mrf.mxu0
    %v428 = vadd.f32 %v301, %v427
    %429 = vdwg.mxu0
    %vm430 = vcmask 130048
    %v431 = vsel %vm430, %v426, -inf
    %432 = vmax.xlane.f32.xlu0 %v431
    %v433 = vpop.xlane.xlu0 %432
    %v434 = vsel %vm430, %v428, -inf
    %435 = vmax.xlane.f32.xlu0 %v434
    %v436 = vpop.xlane.xlu0 %435
    %v437 = vsub.f32 %v426, %v433
    %v438 = vsub.f32 %v428, %v436
    %v439 = vmul.f32 %v437, 1.442695
    %v440 = vpow.pop %v439
    %v441 = vmul.f32 %v438, 1.442695
    %v442 = vpow.pop %v441
    %v443 = vsel %vm430, %v440, 0.0
    %444 = vadd.xlane.f32.xlu0 %v443
    %v445 = vpop.xlane.xlu0 %444
    %v446 = vsel %vm430, %v442, 0.0
    %447 = vadd.xlane.f32.xlu0 %v446
    %v448 = vpop.xlane.xlu0 %447
    %v449 = vrcp.pop %v445
    %v450 = vrcp.pop %v448
    %v451 = vmul.f32 %v440, %v449
    %v452 = vmul.f32 %v442, %v450
    %v453 = vpack.c.bf16 %v452, %v451
    %454 = vrot.lane.b32.xlu0 %v406, 64
    %v455 = vpop.permute.xlu0 %454
    %v458 = vsel %vm430, %v453, 0
    %460 = vmatpush.bf16.msra.mxu0 0
    %461 = vmatpush.bf16.msra.mxu0 0
    %462 = vmatpush.bf16.msra.mxu0 0
    %463 = vmatpush.bf16.msra.mxu0 0
    %464 = vmatpush.bf16.msra.mxu0 0
    %465 = vmatpush.bf16.msra.mxu0 0
    %466 = vmatpush.bf16.msra.mxu0 0
    %467 = vmatpush.bf16.msra.mxu0 %v455
    %468 = vmatmul.bf16.gmra.mxu0 %v458
    %v469 = vpop.f32.mrf.mxu0
    %v470 = vadd.f32 0.0, %v469
    %v471 = vpop.f32.mrf.mxu0
    %v472 = vadd.f32 0.0, %v471
    %473 = vdwg.mxu0
    %474 = vrot.lane.b32.xlu0 %v406, 120
    %v475 = vpop.permute.xlu0 %474
    %476 = vrot.lane.b32.xlu0 %v406, 88
    %v477 = vpop.permute.xlu0 %476
    %v479 = vsel %vm409, %v475, 0
    %v482 = vsel %vm409, %v477, 0
    %484 = vmatpush.bf16.xpose.msra.mxu0 0
    %485 = vmatpush.bf16.xpose.msra.mxu0 0
    %486 = vmatpush.bf16.xpose.msra.mxu0 0
    %487 = vmatpush.bf16.xpose.msra.mxu0 0
    %488 = vmatpush.bf16.xpose.msra.mxu0 0
    %489 = vmatpush.bf16.xpose.msra.mxu0 0
    %490 = vmatpush.bf16.xpose.msra.mxu0 0
    %491 = vmatpush.bf16.xpose.msra.mxu0 %v482
    %492 = vmatmul.bf16.gmra.mxu0 %v479
    %v493 = vpop.f32.mrf.mxu0
    %v494 = vadd.f32 %v300, %v493
    %v495 = vpop.f32.mrf.mxu0
    %v496 = vadd.f32 %v301, %v495
    %497 = vdwg.mxu0
    %v498 = vsel %vm430, %v494, -inf
    %499 = vmax.xlane.f32.xlu0 %v498
    %v500 = vpop.xlane.xlu0 %499
    %v501 = vsel %vm430, %v496, -inf
    %502 = vmax.xlane.f32.xlu0 %v501
    %v503 = vpop.xlane.xlu0 %502
    %v504 = vsub.f32 %v494, %v500
    %v505 = vsub.f32 %v496, %v503
    %v506 = vmul.f32 %v504, 1.442695
    %v507 = vpow.pop %v506
    %v508 = vmul.f32 %v505, 1.442695
    %v509 = vpow.pop %v508
    %v510 = vsel %vm430, %v507, 0.0
    %511 = vadd.xlane.f32.xlu0 %v510
    %v512 = vpop.xlane.xlu0 %511
    %v513 = vsel %vm430, %v509, 0.0
    %514 = vadd.xlane.f32.xlu0 %v513
    %v515 = vpop.xlane.xlu0 %514
    %v516 = vrcp.pop %v512
    %v517 = vrcp.pop %v515
    %v518 = vmul.f32 %v507, %v516
    %v519 = vmul.f32 %v509, %v517
    %v520 = vpack.c.bf16 %v519, %v518
    %521 = vrot.lane.b32.xlu0 %v406, 56
    %v522 = vpop.permute.xlu0 %521
    %v525 = vsel %vm430, %v520, 0
    %527 = vmatpush.bf16.msra.mxu0 0
    %528 = vmatpush.bf16.msra.mxu0 0
    %529 = vmatpush.bf16.msra.mxu0 0
    %530 = vmatpush.bf16.msra.mxu0 0
    %531 = vmatpush.bf16.msra.mxu0 0
    %532 = vmatpush.bf16.msra.mxu0 0
    %533 = vmatpush.bf16.msra.mxu0 0
    %534 = vmatpush.bf16.msra.mxu0 %v522
    %535 = vmatmul.bf16.gmra.mxu0 %v525
    %v536 = vpop.f32.mrf.mxu0
    %v537 = vadd.f32 0.0, %v536
    %v538 = vpop.f32.mrf.mxu0
    %v539 = vadd.f32 0.0, %v538
    %540 = vdwg.mxu0
    %541 = vrot.lane.b32.xlu0 %v406, 112
    %v542 = vpop.permute.xlu0 %541
    %543 = vrot.lane.b32.xlu0 %v406, 80
    %v544 = vpop.permute.xlu0 %543
    %v546 = vsel %vm409, %v542, 0
    %v549 = vsel %vm409, %v544, 0
    %551 = vmatpush.bf16.xpose.msra.mxu0 0
    %552 = vmatpush.bf16.xpose.msra.mxu0 0
    %553 = vmatpush.bf16.xpose.msra.mxu0 0
    %554 = vmatpush.bf16.xpose.msra.mxu0 0
    %555 = vmatpush.bf16.xpose.msra.mxu0 0
    %556 = vmatpush.bf16.xpose.msra.mxu0 0
    %557 = vmatpush.bf16.xpose.msra.mxu0 0
    %558 = vmatpush.bf16.xpose.msra.mxu0 %v549
    %559 = vmatmul.bf16.gmra.mxu0 %v546
    %v560 = vpop.f32.mrf.mxu0
    %v561 = vadd.f32 %v300, %v560
    %v562 = vpop.f32.mrf.mxu0
    %v563 = vadd.f32 %v301, %v562
    %564 = vdwg.mxu0
    %v565 = vsel %vm430, %v561, -inf
    %566 = vmax.xlane.f32.xlu0 %v565
    %v567 = vpop.xlane.xlu0 %566
    %v568 = vsel %vm430, %v563, -inf
    %569 = vmax.xlane.f32.xlu0 %v568
    %v570 = vpop.xlane.xlu0 %569
    %v571 = vsub.f32 %v561, %v567
    %v572 = vsub.f32 %v563, %v570
    %v573 = vmul.f32 %v571, 1.442695
    %v574 = vpow.pop %v573
    %v575 = vmul.f32 %v572, 1.442695
    %v576 = vpow.pop %v575
    %v577 = vsel %vm430, %v574, 0.0
    %578 = vadd.xlane.f32.xlu0 %v577
    %v579 = vpop.xlane.xlu0 %578
    %v580 = vsel %vm430, %v576, 0.0
    %581 = vadd.xlane.f32.xlu0 %v580
    %v582 = vpop.xlane.xlu0 %581
    %v583 = vrcp.pop %v579
    %v584 = vrcp.pop %v582
    %v585 = vmul.f32 %v574, %v583
    %v586 = vmul.f32 %v576, %v584
    %v587 = vpack.c.bf16 %v586, %v585
    %588 = vrot.lane.b32.xlu0 %v406, 48
    %v589 = vpop.permute.xlu0 %588
    %v592 = vsel %vm430, %v587, 0
    %594 = vmatpush.bf16.msra.mxu0 0
    %595 = vmatpush.bf16.msra.mxu0 0
    %596 = vmatpush.bf16.msra.mxu0 0
    %597 = vmatpush.bf16.msra.mxu0 0
    %598 = vmatpush.bf16.msra.mxu0 0
    %599 = vmatpush.bf16.msra.mxu0 0
    %600 = vmatpush.bf16.msra.mxu0 0
    %601 = vmatpush.bf16.msra.mxu0 %v589
    %602 = vmatmul.bf16.gmra.mxu0 %v592
    %v603 = vpop.f32.mrf.mxu0
    %v604 = vadd.f32 0.0, %v603
    %v605 = vpop.f32.mrf.mxu0
    %v606 = vadd.f32 0.0, %v605
    %607 = vdwg.mxu0
    %608 = vrot.lane.b32.xlu0 %v406, 104
    %v609 = vpop.permute.xlu0 %608
    %610 = vrot.lane.b32.xlu0 %v406, 72
    %v611 = vpop.permute.xlu0 %610
    %v613 = vsel %vm409, %v609, 0
    %v616 = vsel %vm409, %v611, 0
    %618 = vmatpush.bf16.xpose.msra.mxu0 0
    %619 = vmatpush.bf16.xpose.msra.mxu0 0
    %620 = vmatpush.bf16.xpose.msra.mxu0 0
    %621 = vmatpush.bf16.xpose.msra.mxu0 0
    %622 = vmatpush.bf16.xpose.msra.mxu0 0
    %623 = vmatpush.bf16.xpose.msra.mxu0 0
    %624 = vmatpush.bf16.xpose.msra.mxu0 0
    %625 = vmatpush.bf16.xpose.msra.mxu0 %v616
    %626 = vmatmul.bf16.gmra.mxu0 %v613
    %v627 = vpop.f32.mrf.mxu0
    %v628 = vadd.f32 %v300, %v627
    %v629 = vpop.f32.mrf.mxu0
    %v630 = vadd.f32 %v301, %v629
    %631 = vdwg.mxu0
    %v632 = vsel %vm430, %v628, -inf
    %633 = vmax.xlane.f32.xlu0 %v632
    %v634 = vpop.xlane.xlu0 %633
    %v635 = vsel %vm430, %v630, -inf
    %636 = vmax.xlane.f32.xlu0 %v635
    %v637 = vpop.xlane.xlu0 %636
    %v638 = vsub.f32 %v628, %v634
    %v639 = vsub.f32 %v630, %v637
    %v640 = vmul.f32 %v638, 1.442695
    %v641 = vpow.pop %v640
    %v642 = vmul.f32 %v639, 1.442695
    %v643 = vpow.pop %v642
    %v644 = vsel %vm430, %v641, 0.0
    %645 = vadd.xlane.f32.xlu0 %v644
    %v646 = vpop.xlane.xlu0 %645
    %v647 = vsel %vm430, %v643, 0.0
    %648 = vadd.xlane.f32.xlu0 %v647
    %v649 = vpop.xlane.xlu0 %648
    %v650 = vrcp.pop %v646
    %v651 = vrcp.pop %v649
    %v652 = vmul.f32 %v641, %v650
    %v653 = vmul.f32 %v643, %v651
    %v654 = vpack.c.bf16 %v653, %v652
    %655 = vrot.lane.b32.xlu0 %v406, 40
    %v656 = vpop.permute.xlu0 %655
    %v659 = vsel %vm430, %v654, 0
    %661 = vmatpush.bf16.msra.mxu0 0
    %662 = vmatpush.bf16.msra.mxu0 0
    %663 = vmatpush.bf16.msra.mxu0 0
    %664 = vmatpush.bf16.msra.mxu0 0
    %665 = vmatpush.bf16.msra.mxu0 0
    %666 = vmatpush.bf16.msra.mxu0 0
    %667 = vmatpush.bf16.msra.mxu0 0
    %668 = vmatpush.bf16.msra.mxu0 %v656
    %669 = vmatmul.bf16.gmra.mxu0 %v659
    %v670 = vpop.f32.mrf.mxu0
    %v671 = vadd.f32 0.0, %v670
    %v672 = vpop.f32.mrf.mxu0
    %v673 = vadd.f32 0.0, %v672
    %674 = vdwg.mxu0
    %677 = vrot.lane.b32.xlu0 %v537, 8
    %v678 = vpop.permute.xlu0 %677
    %679 = vrot.lane.b32.xlu0 %v539, 8
    %v680 = vpop.permute.xlu0 %679
    %685 = vrot.lane.b32.xlu0 %v604, 16
    %v686 = vpop.permute.xlu0 %685
    %687 = vrot.lane.b32.xlu0 %v606, 16
    %v688 = vpop.permute.xlu0 %687
    %693 = vrot.lane.b32.xlu0 %v671, 24
    %v694 = vpop.permute.xlu0 %693
    %695 = vrot.lane.b32.xlu0 %v673, 24
    %v696 = vpop.permute.xlu0 %695
    %v699 = vsel %vm409, %v470, %v678
    %v700 = vsel %vm409, %v472, %v680
    %v701 = vsel %vm430, %v699, %v686
    %v702 = vsel %vm430, %v700, %v688
    %vm703 = vcmask 195584
    %v704 = vsel %vm703, %v701, %v694
    %v705 = vsel %vm703, %v702, %v696
    %v706 = vpack.c.bf16 %v705, %v704
    %v707 = vld [vmem:[#allocation6] sm:$0xf]
    %v708 = vld [vmem:[#allocation6 + $0x4] sm:$0xf]
    %v709 = vld [vmem:[#allocation6 + $0x8] sm:$0xf]
    %v710 = vld [vmem:[#allocation6 + $0xc] sm:$0xf]
    %v715 = vunpack.c.l.b16 %v707
    %v716 = vunpack.c.l.b16 %v708
    %v717 = vunpack.c.l.b16 %v709
    %v718 = vunpack.c.l.b16 %v710
    %v719 = vpack.c.b16 %v716, %v715
    %v720 = vpack.c.b16 %v718, %v717
    %v724 = vsel %vm304, %v706, 0
    %726 = vmatpush.bf16.msra.mxu0 0
    %727 = vmatpush.bf16.msra.mxu0 0
    %728 = vmatpush.bf16.msra.mxu0 0
    %729 = vmatpush.bf16.msra.mxu0 0
    %730 = vmatpush.bf16.msra.mxu0 0
    %731 = vmatpush.bf16.msra.mxu0 0
    %732 = vmatpush.bf16.msra.mxu0 %v720
    %733 = vmatpush.bf16.msra.mxu0 %v719
    %734 = vmatmul.bf16.gmra.mxu0 %v724
    %v735 = vpop.f32.mrf.mxu0
    %v736 = vadd.f32 0.0, %v735
    %v737 = vpop.f32.mrf.mxu0
    %v738 = vadd.f32 0.0, %v737
    %739 = vdwg.mxu0
    %v740 = vsel %vm304, %v736, -inf
    %741 = vmax.xlane.f32.xlu0 %v740
    %v742 = vpop.xlane.xlu0 %741
    %v743 = vsel %vm304, %v738, -inf
    %744 = vmax.xlane.f32.xlu0 %v743
    %v745 = vpop.xlane.xlu0 %744
    %v746 = vsub.f32 %v736, %v742
    %v747 = vsub.f32 %v738, %v745
    %v748 = vmul.f32 %v746, 1.442695
    %v749 = vpow.pop %v748
    %v750 = vmul.f32 %v747, 1.442695
    %v751 = vpow.pop %v750
    %v752 = vsel %vm304, %v749, 0.0
    %753 = vadd.xlane.f32.xlu0 %v752
    %v754 = vpop.xlane.xlu0 %753
    %v755 = vsel %vm304, %v751, 0.0
    %756 = vadd.xlane.f32.xlu0 %v755
    %v757 = vpop.xlane.xlu0 %756
    %v758 = vrcp.pop %v754
    %v759 = vrcp.pop %v757
    %v760 = vmul.f32 %v749, %v758
    %v761 = vmul.f32 %v751, %v759
    %v762 = vadd.f32 %v760, 1.0
    %v763 = vadd.f32 %v761, 1.0
    %v764 = vmul.f32 %v282, %v762
    %v765 = vmul.f32 %v283, %v763
    %v766 = vld [vmem:[#allocation7] sm:$0x1]
    %v767 = vld [vmem:[#allocation9] sm:$0x1]
    %v768 = vsel %vm304, %v764, 0.0
    %769 = vadd.xlane.f32.xlu0 %v768
    %v770 = vpop.xlane.xlu0 %769
    %v771 = vsel %vm304, %v765, 0.0
    %772 = vadd.xlane.f32.xlu0 %v771
    %v773 = vpop.xlane.xlu0 %772
    %v774 = vmul.f32 %v770, %v317
    %v775 = vmul.f32 %v773, %v317
    %v776 = vsub.f32 %v764, %v774
    %v777 = vsub.f32 %v765, %v775
    %v778 = vmul.f32 %v776, %v776
    %v779 = vmul.f32 %v777, %v777
    %v780 = vsel %vm304, %v778, 0.0
    %781 = vadd.xlane.f32.xlu0 %v780
    %v782 = vpop.xlane.xlu0 %781
    %v783 = vsel %vm304, %v779, 0.0
    %784 = vadd.xlane.f32.xlu0 %v783
    %v785 = vpop.xlane.xlu0 %784
    %v786 = vmul.f32 %v782, %v317
    %v787 = vmul.f32 %v785, %v317
    %v788 = vadd.f32 %v786, 1e-05
    %v789 = vadd.f32 %v787, 1e-05
    %v790 = vrsqrt.pop %v788
    %v791 = vmul.f32 %v790, %v788
    %v792 = vmul.f32 %v791, %v790
    %v793 = vmul.f32 0.5, %v792
    %v794 = vsub.f32 1.5, %v793
    %v795 = vmul.f32 %v790, %v794
    %vm796 = vweird.f32 %v788
    %vm797 = vweird.f32 %v790
    %vm798 = vmor %vm796, %vm797
    %v799 = vsel %vm798, %v790, %v795
    %v800 = vrsqrt.pop %v789
    %v801 = vmul.f32 %v800, %v789
    %v802 = vmul.f32 %v801, %v800
    %v803 = vmul.f32 0.5, %v802
    %v804 = vsub.f32 1.5, %v803
    %v805 = vmul.f32 %v800, %v804
    %vm806 = vweird.f32 %v789
    %vm807 = vweird.f32 %v800
    %vm808 = vmor %vm806, %vm807
    %v809 = vsel %vm808, %v800, %v805
    %v810 = vmul.f32 %v776, %v799
    %v811 = vmul.f32 %v777, %v809
    %v813 = vperm.slane %v766, 0
    %v815 = vmul.f32 %v810, %v813
    %v816 = vmul.f32 %v811, %v813
    %v818 = vperm.slane %v767, 0
    %v820 = vadd.f32 %v815, %v818
    %v821 = vadd.f32 %v816, %v818
    %v822 = vpack.c.bf16 %v821, %v820
    %v823 = vld [vmem:[#allocation10] sm:$0xf]
    %v824 = vld [vmem:[#allocation10 + $0x4] sm:$0xf]
    %v825 = vld [vmem:[#allocation10 + $0x8] sm:$0xf]
    %v826 = vld [vmem:[#allocation10 + $0xc] sm:$0xf]
    %v827 = vld [vmem:[#allocation12] sm:$0x1]
    %v829 = vperm.slane %v827, 0
    %v835 = vunpack.c.l.b16 %v823
    %v836 = vunpack.c.l.b16 %v824
    %v837 = vunpack.c.l.b16 %v825
    %v838 = vunpack.c.l.b16 %v826
    %v839 = vpack.c.b16 %v836, %v835
    %v840 = vpack.c.b16 %v838, %v837
    %v844 = vsel %vm304, %v822, 0
    %846 = vmatpush.bf16.msra.mxu0 0
    %847 = vmatpush.bf16.msra.mxu0 0
    %848 = vmatpush.bf16.msra.mxu0 0
    %849 = vmatpush.bf16.msra.mxu0 0
    %850 = vmatpush.bf16.msra.mxu0 0
    %851 = vmatpush.bf16.msra.mxu0 0
    %852 = vmatpush.bf16.msra.mxu0 %v840
    %853 = vmatpush.bf16.msra.mxu0 %v839
    %854 = vmatmul.bf16.gmra.mxu0 %v844
    %v855 = vpop.f32.mrf.mxu0
    %v856 = vadd.f32 %v829, %v855
    %v857 = vpop.f32.mrf.mxu0
    %v858 = vadd.f32 %v829, %v857
    %859 = vdwg.mxu0
    %v860 = vmul.f32 %v856, 0.5
    %v861 = vmul.f32 %v858, 0.5
    %v862 = vmul.f32 %v856, 0.70710677
    %v863 = vmul.f32 %v858, 0.70710677
    %v864 = vmul.f32 %v862, %v862
    %v865 = vmin.f32 16.0, %v864
    %v866 = vmul.f32 %v865, 2.1237322e-06
    %v867 = vadd.f32 %v866, 0.00028619796
    %v868 = vmul.f32 %v865, %v867
    %v869 = vadd.f32 %v868, 0.0036580483
    %v870 = vmul.f32 %v865, %v869
    %v871 = vadd.f32 %v870, 0.05243302
    %v872 = vmul.f32 %v865, %v871
    %v873 = vadd.f32 %v872, 0.18741608
    %v874 = vmul.f32 %v865, %v873
    %v875 = vadd.f32 %v874, 1.1283791
    %v876 = vmul.f32 %v862, %v875
    %v877 = vmul.f32 %v865, 3.8918573e-05
    %v878 = vadd.f32 %v877, 0.001143296
    %v879 = vmul.f32 %v865, %v878
    %v880 = vadd.f32 %v879, 0.014752088
    %v881 = vmul.f32 %v865, %v880
    %v882 = vadd.f32 %v881, 0.112945676
    %v883 = vmul.f32 %v865, %v882
    %v884 = vadd.f32 %v883, 0.4994258
    %v885 = vmul.f32 %v865, %v884
    %v886 = vadd.f32 %v885, 1.0
    %v887 = vrcp.pop %v886
    %v888 = vmul.f32 %v886, %v887
    %v889 = vsub.f32 1.0, %v888
    %v890 = vmul.f32 %v887, %v889
    %v891 = vadd.f32 %v887, %v890
    %vm892 = vweird.f32 %v886
    %vm893 = vweird.f32 %v887
    %vm894 = vmor %vm892, %vm893
    %v895 = vsel %vm894, %v887, %v891
    %v896 = vand.u32 2147483647, %v886
    %vm897 = vcmp.eq.f32.partialorder %v896, 8.507059e+37
    %v898 = vand.u32 %v886, 2147483648
    %v899 = vor.u32 1.1754944e-38, %v898
    %v900 = vsel %vm897, %v899, %v895
    %v901 = vmul.f32 %v876, %v900
    %v902 = vmin.f32 %v901, 1.0
    %v903 = vmax.f32 %v902, -1.0
    %v904 = vmul.f32 %v863, %v863
    %v905 = vmin.f32 16.0, %v904
    %v906 = vmul.f32 %v905, 2.1237322e-06
    %v907 = vadd.f32 %v906, 0.00028619796
    %v908 = vmul.f32 %v905, %v907
    %v909 = vadd.f32 %v908, 0.0036580483
    %v910 = vmul.f32 %v905, %v909
    %v911 = vadd.f32 %v910, 0.05243302
    %v912 = vmul.f32 %v905, %v911
    %v913 = vadd.f32 %v912, 0.18741608
    %v914 = vmul.f32 %v905, %v913
    %v915 = vadd.f32 %v914, 1.1283791
    %v916 = vmul.f32 %v863, %v915
    %v917 = vmul.f32 %v905, 3.8918573e-05
    %v918 = vadd.f32 %v917, 0.001143296
    %v919 = vmul.f32 %v905, %v918
    %v920 = vadd.f32 %v919, 0.014752088
    %v921 = vmul.f32 %v905, %v920
    %v922 = vadd.f32 %v921, 0.112945676
    %v923 = vmul.f32 %v905, %v922
    %v924 = vadd.f32 %v923, 0.4994258
    %v925 = vmul.f32 %v905, %v924
    %v926 = vadd.f32 %v925, 1.0
    %v927 = vrcp.pop %v926
    %v928 = vmul.f32 %v926, %v927
    %v929 = vsub.f32 1.0, %v928
    %v930 = vmul.f32 %v927, %v929
    %v931 = vadd.f32 %v927, %v930
    %vm932 = vweird.f32 %v926
    %vm933 = vweird.f32 %v927
    %vm934 = vmor %vm932, %vm933
    %v935 = vsel %vm934, %v927, %v931
    %v936 = vand.u32 2147483647, %v926
    %vm937 = vcmp.eq.f32.partialorder %v936, 8.507059e+37
    %v938 = vand.u32 %v926, 2147483648
    %v939 = vor.u32 1.1754944e-38, %v938
    %v940 = vsel %vm937, %v939, %v935
    %v941 = vmul.f32 %v916, %v940
    %v942 = vmin.f32 %v941, 1.0
    %v943 = vmax.f32 %v942, -1.0
    %v944 = vadd.f32 %v903, 1.0
    %v945 = vadd.f32 %v943, 1.0
    %v946 = vmul.f32 %v860, %v944
    %v947 = vmul.f32 %v861, %v945
    %v948 = vpack.c.bf16 %v947, %v946
    %v949 = vld [vmem:[%s9] sm:$0xf]
    %v950 = vld [vmem:[%s9 + $0x4] sm:$0xf]
    %v951 = vld [vmem:[%s9 + $0x8] sm:$0xf]
    %v952 = vld [vmem:[%s9 + $0xc] sm:$0xf]
    %v953 = vld [vmem:[%s9 + $0x10] sm:$0xf]
    %v954 = vld [vmem:[%s9 + $0x14] sm:$0xf]
    %v955 = vld [vmem:[%s9 + $0x18] sm:$0xf]
    %v956 = vld [vmem:[%s9 + $0x1c] sm:$0xf]
    %v957 = vld [vmem:[#allocation13] sm:$0x1]
    %v959 = vperm.slane %v957, 0
    %v969 = vunpack.c.l.b16 %v949
    %v970 = vunpack.c.l.b16 %v950
    %v971 = vunpack.c.l.b16 %v951
    %v972 = vunpack.c.l.b16 %v952
    %v973 = vunpack.c.l.b16 %v953
    %v974 = vunpack.c.l.b16 %v954
    %v975 = vunpack.c.l.b16 %v955
    %v976 = vunpack.c.l.b16 %v956
    %v977 = vpack.c.b16 %v970, %v969
    %v978 = vpack.c.b16 %v972, %v971
    %v979 = vpack.c.b16 %v974, %v973
    %v980 = vpack.c.b16 %v976, %v975
    %vm985 = vcmask 523264
    %v987 = vsel %vm985, %v948, 0
    %989 = vmatpush.bf16.msra.mxu0 0
    %990 = vmatpush.bf16.msra.mxu0 0
    %991 = vmatpush.bf16.msra.mxu0 0
    %992 = vmatpush.bf16.msra.mxu0 0
    %993 = vmatpush.bf16.msra.mxu0 %v980
    %994 = vmatpush.bf16.msra.mxu0 %v979
    %995 = vmatpush.bf16.msra.mxu0 %v978
    %996 = vmatpush.bf16.msra.mxu0 %v977
    %997 = vmatmul.bf16.gmra.mxu0 %v987
    %v998 = vpop.f32.mrf.mxu0
    %v999 = vadd.f32 %v959, %v998
    %v1000 = vpop.f32.mrf.mxu0
    %v1001 = vadd.f32 %v959, %v1000
    %1002 = vdwg.mxu0
    %v1003 = vadd.f32 %v999, %v999
    %v1004 = vadd.f32 %v1001, %v1001
    %v1005 = vld [vmem:[#allocation15] sm:$0x1]
    %v1006 = vld [vmem:[#allocation16] sm:$0x1]
    %v1007 = vsel %vm304, %v1003, 0.0
    %1008 = vadd.xlane.f32.xlu0 %v1007
    %v1009 = vpop.xlane.xlu0 %1008
    %v1010 = vsel %vm304, %v1004, 0.0
    %1011 = vadd.xlane.f32.xlu0 %v1010
    %v1012 = vpop.xlane.xlu0 %1011
    %v1013 = vmul.f32 %v1009, %v317
    %v1014 = vmul.f32 %v1012, %v317
    %v1015 = vsub.f32 %v1003, %v1013
    %v1016 = vsub.f32 %v1004, %v1014
    %v1017 = vmul.f32 %v1015, %v1015
    %v1018 = vmul.f32 %v1016, %v1016
    %v1019 = vsel %vm304, %v1017, 0.0
    %1020 = vadd.xlane.f32.xlu0 %v1019
    %v1021 = vpop.xlane.xlu0 %1020
    %v1022 = vsel %vm304, %v1018, 0.0
    %1023 = vadd.xlane.f32.xlu0 %v1022
    %v1024 = vpop.xlane.xlu0 %1023
    %v1025 = vmul.f32 %v1021, %v317
    %v1026 = vmul.f32 %v1024, %v317
    %v1027 = vadd.f32 %v1025, 1e-05
    %v1028 = vadd.f32 %v1026, 1e-05
    %v1029 = vrsqrt.pop %v1027
    %v1030 = vmul.f32 %v1029, %v1027
    %v1031 = vmul.f32 %v1030, %v1029
    %v1032 = vmul.f32 0.5, %v1031
    %v1033 = vsub.f32 1.5, %v1032
    %v1034 = vmul.f32 %v1029, %v1033
    %vm1035 = vweird.f32 %v1027
    %vm1036 = vweird.f32 %v1029
    %vm1037 = vmor %vm1035, %vm1036
    %v1038 = vsel %vm1037, %v1029, %v1034
    %v1039 = vrsqrt.pop %v1028
    %v1040 = vmul.f32 %v1039, %v1028
    %v1041 = vmul.f32 %v1040, %v1039
    %v1042 = vmul.f32 0.5, %v1041
    %v1043 = vsub.f32 1.5, %v1042
    %v1044 = vmul.f32 %v1039, %v1043
    %vm1045 = vweird.f32 %v1028
    %vm1046 = vweird.f32 %v1039
    %vm1047 = vmor %vm1045, %vm1046
    %v1048 = vsel %vm1047, %v1039, %v1044
    %v1049 = vmul.f32 %v1015, %v1038
    %v1050 = vmul.f32 %v1016, %v1048
    %v1052 = vperm.slane %v1005, 0
    %v1054 = vmul.f32 %v1049, %v1052
    %v1055 = vmul.f32 %v1050, %v1052
    %v1057 = vperm.slane %v1006, 0
    %v1059 = vadd.f32 %v1054, %v1057
    %v1060 = vadd.f32 %v1055, %v1057
    %v1061 = vpack.c.bf16 %v1060, %v1059
    %v1062 = vld [vmem:[#allocation18] sm:$0xf]
    %v1063 = vld [vmem:[#allocation18 + $0x4] sm:$0xf]
    %v1064 = vld [vmem:[#allocation18 + $0x8] sm:$0xf]
    %v1065 = vld [vmem:[#allocation18 + $0xc] sm:$0xf]
    %v1070 = vunpack.c.l.b16 %v1062
    %v1071 = vunpack.c.l.b16 %v1063
    %v1072 = vunpack.c.l.b16 %v1064
    %v1073 = vunpack.c.l.b16 %v1065
    %v1074 = vpack.c.b16 %v1071, %v1070
    %v1075 = vpack.c.b16 %v1073, %v1072
    %v1079 = vsel %vm304, %v1061, 0
    %1081 = vmatpush.bf16.msra.mxu0 0
    %1082 = vmatpush.bf16.msra.mxu0 0
    %1083 = vmatpush.bf16.msra.mxu0 0
    %1084 = vmatpush.bf16.msra.mxu0 0
    %1085 = vmatpush.bf16.msra.mxu0 0
    %1086 = vmatpush.bf16.msra.mxu0 0
    %1087 = vmatpush.bf16.msra.mxu0 %v1075
    %1088 = vmatpush.bf16.msra.mxu0 %v1074
    %1089 = vmatmul.bf16.gmra.mxu0 %v1079
    %v1090 = vpop.f32.mrf.mxu0
    %v1091 = vadd.f32 0.0, %v1090
    %v1092 = vpop.f32.mrf.mxu0
    %v1093 = vadd.f32 0.0, %v1092
    %1094 = vdwg.mxu0
    %v1095 = vpack.c.bf16 %v1091, %v1091
    %v1096 = vpack.c.bf16 %v1093, %v1093
    %v1099 = vunpack.c.l.b16 %v1095
    %v1100 = vunpack.c.l.b16 %v1096
    %v1101 = vpack.c.b16 %v1100, %v1099
    %1102 = vrot.lane.b32.xlu0 %v1101, 96
    %v1103 = vpop.permute.xlu0 %1102
    %v1105 = vsel %vm409, %v1101, 0
    %v1108 = vsel %vm409, %v1103, 0
    %1110 = vmatpush.bf16.xpose.msra.mxu0 0
    %1111 = vmatpush.bf16.xpose.msra.mxu0 0
    %1112 = vmatpush.bf16.xpose.msra.mxu0 0
    %1113 = vmatpush.bf16.xpose.msra.mxu0 0
    %1114 = vmatpush.bf16.xpose.msra.mxu0 0
    %1115 = vmatpush.bf16.xpose.msra.mxu0 0
    %1116 = vmatpush.bf16.xpose.msra.mxu0 0
    %1117 = vmatpush.bf16.xpose.msra.mxu0 %v1108
    %1118 = vmatmul.bf16.gmra.mxu0 %v1105
    %v1119 = vpop.f32.mrf.mxu0
    %v1120 = vadd.f32 %v300, %v1119
    %v1121 = vpop.f32.mrf.mxu0
    %v1122 = vadd.f32 %v301, %v1121
    %1123 = vdwg.mxu0
    %v1124 = vsel %vm430, %v1120, -inf
    %1125 = vmax.xlane.f32.xlu0 %v1124
    %v1126 = vpop.xlane.xlu0 %1125
    %v1127 = vsel %vm430, %v1122, -inf
    %1128 = vmax.xlane.f32.xlu0 %v1127
    %v1129 = vpop.xlane.xlu0 %1128
    %v1130 = vsub.f32 %v1120, %v1126
    %v1131 = vsub.f32 %v1122, %v1129
    %v1132 = vmul.f32 %v1130, 1.442695
    %v1133 = vpow.pop %v1132
    %v1134 = vmul.f32 %v1131, 1.442695
    %v1135 = vpow.pop %v1134
    %v1136 = vsel %vm430, %v1133, 0.0
    %1137 = vadd.xlane.f32.xlu0 %v1136
    %v1138 = vpop.xlane.xlu0 %1137
    %v1139 = vsel %vm430, %v1135, 0.0
    %1140 = vadd.xlane.f32.xlu0 %v1139
    %v1141 = vpop.xlane.xlu0 %1140
    %v1142 = vrcp.pop %v1138
    %v1143 = vrcp.pop %v1141
    %v1144 = vmul.f32 %v1133, %v1142
    %v1145 = vmul.f32 %v1135, %v1143
    %v1146 = vpack.c.bf16 %v1145, %v1144
    %1147 = vrot.lane.b32.xlu0 %v1101, 64
    %v1148 = vpop.permute.xlu0 %1147
    %v1151 = vsel %vm430, %v1146, 0
    %1153 = vmatpush.bf16.msra.mxu0 0
    %1154 = vmatpush.bf16.msra.mxu0 0
    %1155 = vmatpush.bf16.msra.mxu0 0
    %1156 = vmatpush.bf16.msra.mxu0 0
    %1157 = vmatpush.bf16.msra.mxu0 0
    %1158 = vmatpush.bf16.msra.mxu0 0
    %1159 = vmatpush.bf16.msra.mxu0 0
    %1160 = vmatpush.bf16.msra.mxu0 %v1148
    %1161 = vmatmul.bf16.gmra.mxu0 %v1151
    %v1162 = vpop.f32.mrf.mxu0
    %v1163 = vadd.f32 0.0, %v1162
    %v1164 = vpop.f32.mrf.mxu0
    %v1165 = vadd.f32 0.0, %v1164
    %1166 = vdwg.mxu0
    %1167 = vrot.lane.b32.xlu0 %v1101, 120
    %v1168 = vpop.permute.xlu0 %1167
    %1169 = vrot.lane.b32.xlu0 %v1101, 88
    %v1170 = vpop.permute.xlu0 %1169
    %v1172 = vsel %vm409, %v1168, 0
    %v1175 = vsel %vm409, %v1170, 0
    %1177 = vmatpush.bf16.xpose.msra.mxu0 0
    %1178 = vmatpush.bf16.xpose.msra.mxu0 0
    %1179 = vmatpush.bf16.xpose.msra.mxu0 0
    %1180 = vmatpush.bf16.xpose.msra.mxu0 0
    %1181 = vmatpush.bf16.xpose.msra.mxu0 0
    %1182 = vmatpush.bf16.xpose.msra.mxu0 0
    %1183 = vmatpush.bf16.xpose.msra.mxu0 0
    %1184 = vmatpush.bf16.xpose.msra.mxu0 %v1175
    %1185 = vmatmul.bf16.gmra.mxu0 %v1172
    %v1186 = vpop.f32.mrf.mxu0
    %v1187 = vadd.f32 %v300, %v1186
    %v1188 = vpop.f32.mrf.mxu0
    %v1189 = vadd.f32 %v301, %v1188
    %1190 = vdwg.mxu0
    %v1191 = vsel %vm430, %v1187, -inf
    %1192 = vmax.xlane.f32.xlu0 %v1191
    %v1193 = vpop.xlane.xlu0 %1192
    %v1194 = vsel %vm430, %v1189, -inf
    %1195 = vmax.xlane.f32.xlu0 %v1194
    %v1196 = vpop.xlane.xlu0 %1195
    %v1197 = vsub.f32 %v1187, %v1193
    %v1198 = vsub.f32 %v1189, %v1196
    %v1199 = vmul.f32 %v1197, 1.442695
    %v1200 = vpow.pop %v1199
    %v1201 = vmul.f32 %v1198, 1.442695
    %v1202 = vpow.pop %v1201
    %v1203 = vsel %vm430, %v1200, 0.0
    %1204 = vadd.xlane.f32.xlu0 %v1203
    %v1205 = vpop.xlane.xlu0 %1204
    %v1206 = vsel %vm430, %v1202, 0.0
    %1207 = vadd.xlane.f32.xlu0 %v1206
    %v1208 = vpop.xlane.xlu0 %1207
    %v1209 = vrcp.pop %v1205
    %v1210 = vrcp.pop %v1208
    %v1211 = vmul.f32 %v1200, %v1209
    %v1212 = vmul.f32 %v1202, %v1210
    %v1213 = vpack.c.bf16 %v1212, %v1211
    %1214 = vrot.lane.b32.xlu0 %v1101, 56
    %v1215 = vpop.permute.xlu0 %1214
    %v1218 = vsel %vm430, %v1213, 0
    %1220 = vmatpush.bf16.msra.mxu0 0
    %1221 = vmatpush.bf16.msra.mxu0 0
    %1222 = vmatpush.bf16.msra.mxu0 0
    %1223 = vmatpush.bf16.msra.mxu0 0
    %1224 = vmatpush.bf16.msra.mxu0 0
    %1225 = vmatpush.bf16.msra.mxu0 0
    %1226 = vmatpush.bf16.msra.mxu0 0
    %1227 = vmatpush.bf16.msra.mxu0 %v1215
    %1228 = vmatmul.bf16.gmra.mxu0 %v1218
    %v1229 = vpop.f32.mrf.mxu0
    %v1230 = vadd.f32 0.0, %v1229
    %v1231 = vpop.f32.mrf.mxu0
    %v1232 = vadd.f32 0.0, %v1231
    %1233 = vdwg.mxu0
    %1234 = vrot.lane.b32.xlu0 %v1101, 112
    %v1235 = vpop.permute.xlu0 %1234
    %1236 = vrot.lane.b32.xlu0 %v1101, 80
    %v1237 = vpop.permute.xlu0 %1236
    %v1239 = vsel %vm409, %v1235, 0
    %v1242 = vsel %vm409, %v1237, 0
    %1244 = vmatpush.bf16.xpose.msra.mxu0 0
    %1245 = vmatpush.bf16.xpose.msra.mxu0 0
    %1246 = vmatpush.bf16.xpose.msra.mxu0 0
    %1247 = vmatpush.bf16.xpose.msra.mxu0 0
    %1248 = vmatpush.bf16.xpose.msra.mxu0 0
    %1249 = vmatpush.bf16.xpose.msra.mxu0 0
    %1250 = vmatpush.bf16.xpose.msra.mxu0 0
    %1251 = vmatpush.bf16.xpose.msra.mxu0 %v1242
    %1252 = vmatmul.bf16.gmra.mxu0 %v1239
    %v1253 = vpop.f32.mrf.mxu0
    %v1254 = vadd.f32 %v300, %v1253
    %v1255 = vpop.f32.mrf.mxu0
    %v1256 = vadd.f32 %v301, %v1255
    %1257 = vdwg.mxu0
    %v1258 = vsel %vm430, %v1254, -inf
    %1259 = vmax.xlane.f32.xlu0 %v1258
    %v1260 = vpop.xlane.xlu0 %1259
    %v1261 = vsel %vm430, %v1256, -inf
    %1262 = vmax.xlane.f32.xlu0 %v1261
    %v1263 = vpop.xlane.xlu0 %1262
    %v1264 = vsub.f32 %v1254, %v1260
    %v1265 = vsub.f32 %v1256, %v1263
    %v1266 = vmul.f32 %v1264, 1.442695
    %v1267 = vpow.pop %v1266
    %v1268 = vmul.f32 %v1265, 1.442695
    %v1269 = vpow.pop %v1268
    %v1270 = vsel %vm430, %v1267, 0.0
    %1271 = vadd.xlane.f32.xlu0 %v1270
    %v1272 = vpop.xlane.xlu0 %1271
    %v1273 = vsel %vm430, %v1269, 0.0
    %1274 = vadd.xlane.f32.xlu0 %v1273
    %v1275 = vpop.xlane.xlu0 %1274
    %v1276 = vrcp.pop %v1272
    %v1277 = vrcp.pop %v1275
    %v1278 = vmul.f32 %v1267, %v1276
    %v1279 = vmul.f32 %v1269, %v1277
    %v1280 = vpack.c.bf16 %v1279, %v1278
    %1281 = vrot.lane.b32.xlu0 %v1101, 48
    %v1282 = vpop.permute.xlu0 %1281
    %v1285 = vsel %vm430, %v1280, 0
    %1287 = vmatpush.bf16.msra.mxu0 0
    %1288 = vmatpush.bf16.msra.mxu0 0
    %1289 = vmatpush.bf16.msra.mxu0 0
    %1290 = vmatpush.bf16.msra.mxu0 0
    %1291 = vmatpush.bf16.msra.mxu0 0
    %1292 = vmatpush.bf16.msra.mxu0 0
    %1293 = vmatpush.bf16.msra.mxu0 0
    %1294 = vmatpush.bf16.msra.mxu0 %v1282
    %1295 = vmatmul.bf16.gmra.mxu0 %v1285
    %v1296 = vpop.f32.mrf.mxu0
    %v1297 = vadd.f32 0.0, %v1296
    %v1298 = vpop.f32.mrf.mxu0
    %v1299 = vadd.f32 0.0, %v1298
    %1300 = vdwg.mxu0
    %1301 = vrot.lane.b32.xlu0 %v1101, 104
    %v1302 = vpop.permute.xlu0 %1301
    %1303 = vrot.lane.b32.xlu0 %v1101, 72
    %v1304 = vpop.permute.xlu0 %1303
    %v1306 = vsel %vm409, %v1302, 0
    %v1309 = vsel %vm409, %v1304, 0
    %1311 = vmatpush.bf16.xpose.msra.mxu0 0
    %1312 = vmatpush.bf16.xpose.msra.mxu0 0
    %1313 = vmatpush.bf16.xpose.msra.mxu0 0
    %1314 = vmatpush.bf16.xpose.msra.mxu0 0
    %1315 = vmatpush.bf16.xpose.msra.mxu0 0
    %1316 = vmatpush.bf16.xpose.msra.mxu0 0
    %1317 = vmatpush.bf16.xpose.msra.mxu0 0
    %1318 = vmatpush.bf16.xpose.msra.mxu0 %v1309
    %1319 = vmatmul.bf16.gmra.mxu0 %v1306
    %v1320 = vpop.f32.mrf.mxu0
    %v1321 = vadd.f32 %v300, %v1320
    %v1322 = vpop.f32.mrf.mxu0
    %v1323 = vadd.f32 %v301, %v1322
    %1324 = vdwg.mxu0
    %v1325 = vsel %vm430, %v1321, -inf
    %1326 = vmax.xlane.f32.xlu0 %v1325
    %v1327 = vpop.xlane.xlu0 %1326
    %v1328 = vsel %vm430, %v1323, -inf
    %1329 = vmax.xlane.f32.xlu0 %v1328
    %v1330 = vpop.xlane.xlu0 %1329
    %v1331 = vsub.f32 %v1321, %v1327
    %v1332 = vsub.f32 %v1323, %v1330
    %v1333 = vmul.f32 %v1331, 1.442695
    %v1334 = vpow.pop %v1333
    %v1335 = vmul.f32 %v1332, 1.442695
    %v1336 = vpow.pop %v1335
    %v1337 = vsel %vm430, %v1334, 0.0
    %1338 = vadd.xlane.f32.xlu0 %v1337
    %v1339 = vpop.xlane.xlu0 %1338
    %v1340 = vsel %vm430, %v1336, 0.0
    %1341 = vadd.xlane.f32.xlu0 %v1340
    %v1342 = vpop.xlane.xlu0 %1341
    %v1343 = vrcp.pop %v1339
    %v1344 = vrcp.pop %v1342
    %v1345 = vmul.f32 %v1334, %v1343
    %v1346 = vmul.f32 %v1336, %v1344
    %v1347 = vpack.c.bf16 %v1346, %v1345
    %1348 = vrot.lane.b32.xlu0 %v1101, 40
    %v1349 = vpop.permute.xlu0 %1348
    %v1352 = vsel %vm430, %v1347, 0
    %1354 = vmatpush.bf16.msra.mxu0 0
    %1355 = vmatpush.bf16.msra.mxu0 0
    %1356 = vmatpush.bf16.msra.mxu0 0
    %1357 = vmatpush.bf16.msra.mxu0 0
    %1358 = vmatpush.bf16.msra.mxu0 0
    %1359 = vmatpush.bf16.msra.mxu0 0
    %1360 = vmatpush.bf16.msra.mxu0 0
    %1361 = vmatpush.bf16.msra.mxu0 %v1349
    %1362 = vmatmul.bf16.gmra.mxu0 %v1352
    %v1363 = vpop.f32.mrf.mxu0
    %v1364 = vadd.f32 0.0, %v1363
    %v1365 = vpop.f32.mrf.mxu0
    %v1366 = vadd.f32 0.0, %v1365
    %1367 = vdwg.mxu0
    %1370 = vrot.lane.b32.xlu0 %v1230, 8
    %v1371 = vpop.permute.xlu0 %1370
    %1372 = vrot.lane.b32.xlu0 %v1232, 8
    %v1373 = vpop.permute.xlu0 %1372
    %1378 = vrot.lane.b32.xlu0 %v1297, 16
    %v1379 = vpop.permute.xlu0 %1378
    %1380 = vrot.lane.b32.xlu0 %v1299, 16
    %v1381 = vpop.permute.xlu0 %1380
    %1386 = vrot.lane.b32.xlu0 %v1364, 24
    %v1387 = vpop.permute.xlu0 %1386
    %1388 = vrot.lane.b32.xlu0 %v1366, 24
    %v1389 = vpop.permute.xlu0 %1388
    %v1392 = vsel %vm409, %v1163, %v1371
    %v1393 = vsel %vm409, %v1165, %v1373
    %v1394 = vsel %vm430, %v1392, %v1379
    %v1395 = vsel %vm430, %v1393, %v1381
    %v1396 = vsel %vm703, %v1394, %v1387
    %v1397 = vsel %vm703, %v1395, %v1389
    %v1398 = vpack.c.bf16 %v1397, %v1396
    %v1399 = vld [vmem:[#allocation19] sm:$0xf]
    %v1400 = vld [vmem:[#allocation19 + $0x4] sm:$0xf]
    %v1401 = vld [vmem:[#allocation19 + $0x8] sm:$0xf]
    %v1402 = vld [vmem:[#allocation19 + $0xc] sm:$0xf]
    %v1407 = vunpack.c.l.b16 %v1399
    %v1408 = vunpack.c.l.b16 %v1400
    %v1409 = vunpack.c.l.b16 %v1401
    %v1410 = vunpack.c.l.b16 %v1402
    %v1411 = vpack.c.b16 %v1408, %v1407
    %v1412 = vpack.c.b16 %v1410, %v1409
    %v1416 = vsel %vm304, %v1398, 0
    %1418 = vmatpush.bf16.msra.mxu0 0
    %1419 = vmatpush.bf16.msra.mxu0 0
    %1420 = vmatpush.bf16.msra.mxu0 0
    %1421 = vmatpush.bf16.msra.mxu0 0
    %1422 = vmatpush.bf16.msra.mxu0 0
    %1423 = vmatpush.bf16.msra.mxu0 0
    %1424 = vmatpush.bf16.msra.mxu0 %v1412
    %1425 = vmatpush.bf16.msra.mxu0 %v1411
    %1426 = vmatmul.bf16.gmra.mxu0 %v1416
    %v1427 = vpop.f32.mrf.mxu0
    %v1428 = vadd.f32 0.0, %v1427
    %v1429 = vpop.f32.mrf.mxu0
    %v1430 = vadd.f32 0.0, %v1429
    %1431 = vdwg.mxu0
    %v1432 = vsel %vm304, %v1428, -inf
    %1433 = vmax.xlane.f32.xlu0 %v1432
    %v1434 = vpop.xlane.xlu0 %1433
    %v1435 = vsel %vm304, %v1430, -inf
    %1436 = vmax.xlane.f32.xlu0 %v1435
    %v1437 = vpop.xlane.xlu0 %1436
    %v1438 = vsub.f32 %v1428, %v1434
    %v1439 = vsub.f32 %v1430, %v1437
    %v1440 = vmul.f32 %v1438, 1.442695
    %v1441 = vpow.pop %v1440
    %v1442 = vmul.f32 %v1439, 1.442695
    %v1443 = vpow.pop %v1442
    %v1444 = vsel %vm304, %v1441, 0.0
    %1445 = vadd.xlane.f32.xlu0 %v1444
    %v1446 = vpop.xlane.xlu0 %1445
    %v1447 = vsel %vm304, %v1443, 0.0
    %1448 = vadd.xlane.f32.xlu0 %v1447
    %v1449 = vpop.xlane.xlu0 %1448
    %v1450 = vrcp.pop %v1446
    %v1451 = vrcp.pop %v1449
    %v1452 = vmul.f32 %v1441, %v1450
    %v1453 = vmul.f32 %v1443, %v1451
    %v1454 = vadd.f32 %v1452, 1.0
    %v1455 = vadd.f32 %v1453, 1.0
    %v1456 = vmul.f32 %v1003, %v1454
    %v1457 = vmul.f32 %v1004, %v1455
    %v1458 = vld [vmem:[#allocation21] sm:$0x1]
    %v1459 = vld [vmem:[#allocation22] sm:$0x1]
    %v1460 = vsel %vm304, %v1456, 0.0
    %1461 = vadd.xlane.f32.xlu0 %v1460
    %v1462 = vpop.xlane.xlu0 %1461
    %v1463 = vsel %vm304, %v1457, 0.0
    %1464 = vadd.xlane.f32.xlu0 %v1463
    %v1465 = vpop.xlane.xlu0 %1464
    %v1466 = vmul.f32 %v1462, %v317
    %v1467 = vmul.f32 %v1465, %v317
    %v1468 = vsub.f32 %v1456, %v1466
    %v1469 = vsub.f32 %v1457, %v1467
    %v1470 = vmul.f32 %v1468, %v1468
    %v1471 = vmul.f32 %v1469, %v1469
    %v1472 = vsel %vm304, %v1470, 0.0
    %1473 = vadd.xlane.f32.xlu0 %v1472
    %v1474 = vpop.xlane.xlu0 %1473
    %v1475 = vsel %vm304, %v1471, 0.0
    %1476 = vadd.xlane.f32.xlu0 %v1475
    %v1477 = vpop.xlane.xlu0 %1476
    %v1478 = vmul.f32 %v1474, %v317
    %v1479 = vmul.f32 %v1477, %v317
    %v1480 = vadd.f32 %v1478, 1e-05
    %v1481 = vadd.f32 %v1479, 1e-05
    %v1482 = vrsqrt.pop %v1480
    %v1483 = vmul.f32 %v1482, %v1480
    %v1484 = vmul.f32 %v1483, %v1482
    %v1485 = vmul.f32 0.5, %v1484
    %v1486 = vsub.f32 1.5, %v1485
    %v1487 = vmul.f32 %v1482, %v1486
    %vm1488 = vweird.f32 %v1480
    %vm1489 = vweird.f32 %v1482
    %vm1490 = vmor %vm1488, %vm1489
    %v1491 = vsel %vm1490, %v1482, %v1487
    %v1492 = vrsqrt.pop %v1481
    %v1493 = vmul.f32 %v1492, %v1481
    %v1494 = vmul.f32 %v1493, %v1492
    %v1495 = vmul.f32 0.5, %v1494
    %v1496 = vsub.f32 1.5, %v1495
    %v1497 = vmul.f32 %v1492, %v1496
    %vm1498 = vweird.f32 %v1481
    %vm1499 = vweird.f32 %v1492
    %vm1500 = vmor %vm1498, %vm1499
    %v1501 = vsel %vm1500, %v1492, %v1497
    %v1502 = vmul.f32 %v1468, %v1491
    %v1503 = vmul.f32 %v1469, %v1501
    %v1505 = vperm.slane %v1458, 0
    %v1507 = vmul.f32 %v1502, %v1505
    %v1508 = vmul.f32 %v1503, %v1505
    %v1510 = vperm.slane %v1459, 0
    %v1512 = vadd.f32 %v1507, %v1510
    %v1513 = vadd.f32 %v1508, %v1510
    %v1514 = vpack.c.bf16 %v1513, %v1512
    %v1515 = vld [vmem:[#allocation24] sm:$0xf]
    %v1516 = vld [vmem:[#allocation24 + $0x4] sm:$0xf]
    %v1517 = vld [vmem:[#allocation24 + $0x8] sm:$0xf]
    %v1518 = vld [vmem:[#allocation24 + $0xc] sm:$0xf]
    %v1519 = vld [vmem:[%s18] sm:$0x1]
    %v1521 = vperm.slane %v1519, 0
    %v1527 = vunpack.c.l.b16 %v1515
    %v1528 = vunpack.c.l.b16 %v1516
    %v1529 = vunpack.c.l.b16 %v1517
    %v1530 = vunpack.c.l.b16 %v1518
    %v1531 = vpack.c.b16 %v1528, %v1527
    %v1532 = vpack.c.b16 %v1530, %v1529
    %v1536 = vsel %vm304, %v1514, 0
    %1538 = vmatpush.bf16.msra.mxu0 0
    %1539 = vmatpush.bf16.msra.mxu0 0
    %1540 = vmatpush.bf16.msra.mxu0 0
    %1541 = vmatpush.bf16.msra.mxu0 0
    %1542 = vmatpush.bf16.msra.mxu0 0
    %1543 = vmatpush.bf16.msra.mxu0 0
    %1544 = vmatpush.bf16.msra.mxu0 %v1532
    %1545 = vmatpush.bf16.msra.mxu0 %v1531
    %1546 = vmatmul.bf16.gmra.mxu0 %v1536
    %v1547 = vpop.f32.mrf.mxu0
    %v1548 = vadd.f32 %v1521, %v1547
    %v1549 = vpop.f32.mrf.mxu0
    %v1550 = vadd.f32 %v1521, %v1549
    %1551 = vdwg.mxu0
    %v1552 = vmul.f32 %v1548, 0.5
    %v1553 = vmul.f32 %v1550, 0.5
    %v1554 = vmul.f32 %v1548, 0.70710677
    %v1555 = vmul.f32 %v1550, 0.70710677
    %v1556 = vmul.f32 %v1554, %v1554
    %v1557 = vmin.f32 16.0, %v1556
    %v1558 = vmul.f32 %v1557, 2.1237322e-06
    %v1559 = vadd.f32 %v1558, 0.00028619796
    %v1560 = vmul.f32 %v1557, %v1559
    %v1561 = vadd.f32 %v1560, 0.0036580483
    %v1562 = vmul.f32 %v1557, %v1561
    %v1563 = vadd.f32 %v1562, 0.05243302
    %v1564 = vmul.f32 %v1557, %v1563
    %v1565 = vadd.f32 %v1564, 0.18741608
    %v1566 = vmul.f32 %v1557, %v1565
    %v1567 = vadd.f32 %v1566, 1.1283791
    %v1568 = vmul.f32 %v1554, %v1567
    %v1569 = vmul.f32 %v1557, 3.8918573e-05
    %v1570 = vadd.f32 %v1569, 0.001143296
    %v1571 = vmul.f32 %v1557, %v1570
    %v1572 = vadd.f32 %v1571, 0.014752088
    %v1573 = vmul.f32 %v1557, %v1572
    %v1574 = vadd.f32 %v1573, 0.112945676
    %v1575 = vmul.f32 %v1557, %v1574
    %v1576 = vadd.f32 %v1575, 0.4994258
    %v1577 = vmul.f32 %v1557, %v1576
    %v1578 = vadd.f32 %v1577, 1.0
    %v1579 = vrcp.pop %v1578
    %v1580 = vmul.f32 %v1578, %v1579
    %v1581 = vsub.f32 1.0, %v1580
    %v1582 = vmul.f32 %v1579, %v1581
    %v1583 = vadd.f32 %v1579, %v1582
    %vm1584 = vweird.f32 %v1578
    %vm1585 = vweird.f32 %v1579
    %vm1586 = vmor %vm1584, %vm1585
    %v1587 = vsel %vm1586, %v1579, %v1583
    %v1588 = vand.u32 2147483647, %v1578
    %vm1589 = vcmp.eq.f32.partialorder %v1588, 8.507059e+37
    %v1590 = vand.u32 %v1578, 2147483648
    %v1591 = vor.u32 1.1754944e-38, %v1590
    %v1592 = vsel %vm1589, %v1591, %v1587
    %v1593 = vmul.f32 %v1568, %v1592
    %v1594 = vmin.f32 %v1593, 1.0
    %v1595 = vmax.f32 %v1594, -1.0
    %v1596 = vmul.f32 %v1555, %v1555
    %v1597 = vmin.f32 16.0, %v1596
    %v1598 = vmul.f32 %v1597, 2.1237322e-06
    %v1599 = vadd.f32 %v1598, 0.00028619796
    %v1600 = vmul.f32 %v1597, %v1599
    %v1601 = vadd.f32 %v1600, 0.0036580483
    %v1602 = vmul.f32 %v1597, %v1601
    %v1603 = vadd.f32 %v1602, 0.05243302
    %v1604 = vmul.f32 %v1597, %v1603
    %v1605 = vadd.f32 %v1604, 0.18741608
    %v1606 = vmul.f32 %v1597, %v1605
    %v1607 = vadd.f32 %v1606, 1.1283791
    %v1608 = vmul.f32 %v1555, %v1607
    %v1609 = vmul.f32 %v1597, 3.8918573e-05
    %v1610 = vadd.f32 %v1609, 0.001143296
    %v1611 = vmul.f32 %v1597, %v1610
    %v1612 = vadd.f32 %v1611, 0.014752088
    %v1613 = vmul.f32 %v1597, %v1612
    %v1614 = vadd.f32 %v1613, 0.112945676
    %v1615 = vmul.f32 %v1597, %v1614
    %v1616 = vadd.f32 %v1615, 0.4994258
    %v1617 = vmul.f32 %v1597, %v1616
    %v1618 = vadd.f32 %v1617, 1.0
    %v1619 = vrcp.pop %v1618
    %v1620 = vmul.f32 %v1618, %v1619
    %v1621 = vsub.f32 1.0, %v1620
    %v1622 = vmul.f32 %v1619, %v1621
    %v1623 = vadd.f32 %v1619, %v1622
    %vm1624 = vweird.f32 %v1618
    %vm1625 = vweird.f32 %v1619
    %vm1626 = vmor %vm1624, %vm1625
    %v1627 = vsel %vm1626, %v1619, %v1623
    %v1628 = vand.u32 2147483647, %v1618
    %vm1629 = vcmp.eq.f32.partialorder %v1628, 8.507059e+37
    %v1630 = vand.u32 %v1618, 2147483648
    %v1631 = vor.u32 1.1754944e-38, %v1630
    %v1632 = vsel %vm1629, %v1631, %v1627
    %v1633 = vmul.f32 %v1608, %v1632
    %v1634 = vmin.f32 %v1633, 1.0
    %v1635 = vmax.f32 %v1634, -1.0
    %v1636 = vadd.f32 %v1595, 1.0
    %v1637 = vadd.f32 %v1635, 1.0
    %v1638 = vmul.f32 %v1552, %v1636
    %v1639 = vmul.f32 %v1553, %v1637
    %v1640 = vpack.c.bf16 %v1639, %v1638
    %v1641 = vld [vmem:[%s19] sm:$0xf]
    %v1642 = vld [vmem:[%s19 + $0x4] sm:$0xf]
    %v1643 = vld [vmem:[%s19 + $0x8] sm:$0xf]
    %v1644 = vld [vmem:[%s19 + $0xc] sm:$0xf]
    %v1645 = vld [vmem:[%s19 + $0x10] sm:$0xf]
    %v1646 = vld [vmem:[%s19 + $0x14] sm:$0xf]
    %v1647 = vld [vmem:[%s19 + $0x18] sm:$0xf]
    %v1648 = vld [vmem:[%s19 + $0x1c] sm:$0xf]
    %v1649 = vld [vmem:[%s20] sm:$0x1]
    %v1651 = vperm.slane %v1649, 0
    %v1661 = vunpack.c.l.b16 %v1641
    %v1662 = vunpack.c.l.b16 %v1642
    %v1663 = vunpack.c.l.b16 %v1643
    %v1664 = vunpack.c.l.b16 %v1644
    %v1665 = vunpack.c.l.b16 %v1645
    %v1666 = vunpack.c.l.b16 %v1646
    %v1667 = vunpack.c.l.b16 %v1647
    %v1668 = vunpack.c.l.b16 %v1648
    %v1669 = vpack.c.b16 %v1662, %v1661
    %v1670 = vpack.c.b16 %v1664, %v1663
    %v1671 = vpack.c.b16 %v1666, %v1665
    %v1672 = vpack.c.b16 %v1668, %v1667
    %v1678 = vsel %vm985, %v1640, 0
    %1680 = vmatpush.bf16.msra.mxu0 0
    %1681 = vmatpush.bf16.msra.mxu0 0
    %1682 = vmatpush.bf16.msra.mxu0 0
    %1683 = vmatpush.bf16.msra.mxu0 0
    %1684 = vmatpush.bf16.msra.mxu0 %v1672
    %1685 = vmatpush.bf16.msra.mxu0 %v1671
    %1686 = vmatpush.bf16.msra.mxu0 %v1670
    %1687 = vmatpush.bf16.msra.mxu0 %v1669
    %1688 = vmatmul.bf16.gmra.mxu0 %v1678
    %v1689 = vpop.f32.mrf.mxu0
    %v1690 = vadd.f32 %v1651, %v1689
    %v1691 = vpop.f32.mrf.mxu0
    %v1692 = vadd.f32 %v1651, %v1691
    %1693 = vdwg.mxu0
    %1694 = vst [vmem:[%s21] sm:$0xff] %v1690
    %1695 = vst [vmem:[%s21 + $0x8] sm:$0xff] %v1692
    // Predicated region
    $region146: #{transformer_forward.1} parent=1 // pred_check
      _
    $region147: #{transformer_forward.1} parent=1 // pred_check_branch
      %1697 = sbr.rel (0) target = $region149
    $region148: #{transformer_forward.1} parent=1 // pred_region
      _
    $region149: #{transformer_forward.1} parent=1 // pred_fallthru
      _
    // Predicated region
    $region150: #{transformer_forward.1} parent=1 // pred_check
      _
    $region151: #{transformer_forward.1} parent=1 // pred_check_branch
      %1699 = sbr.rel (0) target = $region153
    $region152: #{transformer_forward.1} parent=1 // pred_region
      _
    $region153: #{transformer_forward.1} parent=1 // pred_fallthru
      _
    %1700 = vsyncpa [#allocation3], 1
    %1701 = vsyncpa [#allocation5], 1
    %1702 = vsyncpa [#allocation8], 1
    %1703 = vsyncpa [#allocation11], 1
    %1704 = vsyncpa [#allocation14], 1
    %1705 = vsyncpa [#allocation17], 1
    %1706 = vsyncpa [#allocation20], 1
    %1707 = vsyncpa [#allocation23], 1

</llo_original>
